<compile_context>
chip_gen: v7x
topology: tpu7x:2x2x1
jax: 0.10.0
libtpu: 0.0.40
codegen_flags: <defaults>
</compile_context>

<pallas_src>
import numpy as np
import jax
import jax.numpy as jnp
from jax import lax
from jax.experimental import pallas as pl
from jax.experimental.pallas import tpu as pltpu

NORM_EPS = 1e-12     # matches torch.norm(...) + 1e-12 in the reference module
OUT_PAD = 128        # lane-dense output staging width (real width is nw)


def make_dn4_kernel(top_k: int, shw: int, tile_rows: int, n_samples: int):
    """Kernel for grid = (bs, n_qtiles, nw); the class axis (idx 2) is the reduction axis."""

    def kernel(group_ref, qinv_ref, que_ref, sup_ref, o_ref, acc_ref):
        w = pl.program_id(2)

        @pl.when(w == 0)
        def _init():
            acc_ref[...] = jnp.zeros_like(acc_ref)

        # Cosine similarities of every query descriptor in this tile vs every support
        # descriptor of class w: (tile_rows, C)bf16 @ (C, shw)bf16 -> f32 on the MXU.
        # (query rows are un-normalized; their positive 1/||q|| scale is applied at the end)
        sim = jnp.dot(que_ref[0], sup_ref[0, 0],
                      preferred_element_type=jnp.float32)          # (tile_rows, shw)

        # Exact top-k sum along the support axis.  Ties handled like torch.topk: each step
        # removes exactly one maximal entry (lowest column index first).
        col = lax.broadcasted_iota(jnp.int32, (tile_rows, shw), 1)
        cur = sim
        acc = jnp.zeros((tile_rows, 1), jnp.float32)
        for t in range(top_k):                                      # static, fully unrolled
            m = jnp.max(cur, axis=-1, keepdims=True)
            acc = acc + m
            if t + 1 < top_k:
                first = jnp.min(jnp.where(cur == m, col, shw), axis=-1, keepdims=True)
                cur = jnp.where(col == first, -jnp.inf, cur)

        # Deposit this class's per-row sum into lane w of the resident accumulator.
        lane = lax.broadcasted_iota(jnp.int32, (tile_rows, OUT_PAD), 1)
        acc_ref[...] = jnp.where(lane == w, acc, acc_ref[...])

        @pl.when(w == pl.num_programs(2) - 1)
        def _finalize():
            # deferred query normalization (positive per-row scale), then one full-N MXU
            # matmul with the resident 0/1 group matrix sums the hw locations per sample.
            scaled = acc_ref[...] * qinv_ref[0]                     # (tile_rows, OUT_PAD) f32
            o_ref[0] = jnp.dot(group_ref[...], scaled,
                               preferred_element_type=jnp.float32)  # (n_samples, OUT_PAD)

    return kernel


def _pick_tile_samples(n_que, hw, shw, requested=None):
    """Number of query samples per q-row tile (sample-aligned tiling of the q-row axis).

    Valid choices are divisors of n_que that are multiples of 8 (block layout rule on the
    sublane dims) or n_que itself.  The VMEM budget comes from the chip, so v7x (64 MiB)
    naturally picks ~half the tile of v5e/v6e (128 MiB).
    """
    if requested is not None:
        assert n_que % requested == 0, "tile_samples must divide nw*nq"
        return requested
    try:
        vmem_cap = pltpu.get_tpu_info().vmem_capacity_bytes
    except Exception:
        vmem_cap = 128 << 20
    budget = vmem_cap // 6   # room for sim + top-k temporaries + double-buffered inputs

    candidates = [d for d in range(1, n_que + 1)
                  if n_que % d == 0 and (d % 8 == 0 or d == n_que)]

    def approx_bytes(d):
        rows = d * hw
        return rows * shw * 4 * 3 + rows * OUT_PAD * 4   # sim/cur/col + class accumulator

    fitting = [d for d in candidates if approx_bytes(d) <= budget]
    return max(fitting) if fitting else min(candidates)


def dn4_metric_forward(fm, elabel, glabel, bs, nw, ns, nq, top_k=3, tile_samples=None):
    """Pallas port of DN4Metric.forward.  fm is NCHW: (bs*nw*(ns+nq), C, H, W)."""
    nt, c, fh, fw = fm.shape
    hw = fh * fw
    assert nt == bs * nw * (ns + nq)
    shw = ns * hw
    assert top_k <= shw, "torch.topk would error otherwise"
    assert nw <= OUT_PAD

    n_que = nw * nq
    q_rows = n_que * hw

    # ---- layout plumbing (channels-last local descriptors), all in the wrapper ----
    fm32 = fm.astype(jnp.float32)
    x = jnp.transpose(fm32, (0, 2, 3, 1)).reshape(bs, nw, ns + nq, hw, c)
    sup = x[:, :, :ns].reshape(bs, nw, shw, c)          # support descriptors per class
    que = x[:, :, ns:].reshape(bs, q_rows, c)           # query descriptors, rows = (w, j, x)

    # Support: L2-normalize over C in f32, cast to bf16, pre-transpose to (bs, nw, C, shw)
    # so the in-kernel contraction is a plain (rows, C) @ (C, shw).
    sup_n = sup / (jnp.sqrt(jnp.sum(sup * sup, axis=-1, keepdims=True)) + NORM_EPS)
    supT = jnp.transpose(sup_n, (0, 1, 3, 2)).astype(jnp.bfloat16)   # (bs, nw, C, shw)

    # Query: normalization deferred; pass raw bf16 descriptors + the f32 per-row scale.
    q_inv = 1.0 / (jnp.sqrt(jnp.sum(que * que, axis=-1, keepdims=True)) + NORM_EPS)
    que_b = que.astype(jnp.bfloat16)                                  # (bs, q_rows, C)

    ts = _pick_tile_samples(n_que, hw, shw, tile_samples)
    tile_rows = ts * hw
    n_qtiles = n_que // ts

    # Episode/tile-invariant 0/1 matrix summing the hw locations of each query sample.
    gi = np.arange(ts)[:, None]
    gr = np.arange(tile_rows)[None, :]
    group = jnp.asarray((gr // hw == gi).astype(np.float32))          # (ts, tile_rows)

    kernel = make_dn4_kernel(top_k, shw, tile_rows, ts)

    pred_padded = pl.pallas_call(
        kernel,
        out_shape=jax.ShapeDtypeStruct((bs, n_que, OUT_PAD), jnp.float32),
        grid=(bs, n_qtiles, nw),
        in_specs=[
            # constant index -> DMA'd once, kept resident across the whole grid
            pl.BlockSpec((ts, tile_rows), lambda b, qt, w: (0, 0)),
            pl.BlockSpec((1, tile_rows, 1), lambda b, qt, w: (b, qt, 0)),
            pl.BlockSpec((1, tile_rows, c), lambda b, qt, w: (b, qt, 0)),
            pl.BlockSpec((1, 1, c, shw), lambda b, qt, w: (b, w, 0, 0)),
        ],
        out_specs=pl.BlockSpec((1, ts, OUT_PAD), lambda b, qt, w: (b, qt, 0)),
        scratch_shapes=[pltpu.VMEM((tile_rows, OUT_PAD), jnp.float32)],
        # Default scoped VMEM limit suffices because the tile heuristic is conservative;
        # raise vmem_limit_bytes here only if a larger explicit tile_samples is requested.
        compiler_params=pltpu.CompilerParams(
            dimension_semantics=("parallel", "parallel", "arbitrary")),
    )(group, q_inv, que_b, supT)

    pred = pred_padded[:, :, :nw]                                     # (bs, nw*nq, nw)
    elabel_out = elabel.reshape(bs, nw, ns + nq)[:, :, ns:].reshape(-1)
    return pred, elabel_out


def dn4_reference(fm, bs, nw, ns, nq, top_k):
    """Pure-JAX transcription of the PyTorch DN4Metric.forward (for validation)."""
    nt, c, fh, fw = fm.shape
    hw = fh * fw
    norm = jnp.sqrt(jnp.sum(fm * fm, axis=1, keepdims=True))
    fmn = fm / (norm + NORM_EPS)
    x = fmn.reshape(bs, nw, ns + nq, c, fh, fw)
    sup = jnp.transpose(x[:, :, :ns], (0, 1, 2, 4, 5, 3)).reshape(bs, nw, ns * hw, c)
    que = jnp.transpose(x[:, :, ns:].reshape(bs, nw * nq, c, hw), (0, 1, 3, 2))
    qp = jnp.einsum('bqxc,bwyc->bqwxy', que, sup, precision=lax.Precision.HIGHEST)
    vals, _ = lax.top_k(qp, top_k)
    return vals.sum(axis=(-2, -1))


if __name__ == "__main__":
    key = jax.random.PRNGKey(0)
    bs, nw, ns, nq = 2, 2, 2, 8          # 2 episodes, 2-way, 2-shot, 8 queries per class
    c, fh, fw = 32, 4, 4                 # feature dim / spatial size
    top_k = 3                            # DN4Metric default
    nt = bs * nw * (ns + nq)             # 40 feature maps

    kx, _ = jax.random.split(key)
    fm = jax.random.normal(kx, (nt, c, fh, fw), jnp.float32)
    elabel = jnp.tile(jnp.repeat(jnp.arange(nw, dtype=jnp.int32), ns + nq), bs)   # (nt,)
    glabel = elabel                                                               # unused by forward

    ref = dn4_reference(fm, bs, nw, ns, nq, top_k)
    ref_label = np.tile(np.repeat(np.arange(nw), nq), bs)

    # (a) explicit q-row tiling (2 tiles per episode) to exercise the sample-aligned grid axis
    pred, elabel_out = dn4_metric_forward(fm, elabel, glabel, bs, nw, ns, nq,
                                          top_k=top_k, tile_samples=8)
    jax.block_until_ready(pred)
    assert pred.shape == (bs, nw * nq, nw)
    assert elabel_out.shape == (bs * nw * nq,)
    np.testing.assert_allclose(np.asarray(pred), np.asarray(ref), rtol=2e-2, atol=2e-2)
    np.testing.assert_array_equal(np.asarray(elabel_out), ref_label)

    # (b) auto (VMEM-budget) tile selection
    pred2, _ = dn4_metric_forward(fm, elabel, glabel, bs, nw, ns, nq, top_k=top_k)
    jax.block_until_ready(pred2)
    np.testing.assert_allclose(np.asarray(pred2), np.asarray(ref), rtol=2e-2, atol=2e-2)

    print("KERNEL_OK")
</pallas_src>

<mosaic_0001>
module attributes {stable_mosaic.version = 11 : i64} {
  func.func @kernel(%arg0: i32, %arg1: i32, %arg2: i32, %arg3: memref<8x128xf32, #tpu.memory_space<vmem>>, %arg4: memref<1x128x1xf32, #tpu.memory_space<vmem>>, %arg5: memref<1x128x32xbf16, #tpu.memory_space<vmem>>, %arg6: memref<1x1x32x32xbf16, #tpu.memory_space<vmem>>, %arg7: memref<1x8x128xf32, #tpu.memory_space<vmem>>, %arg8: memref<128x128xf32, #tpu.memory_space<vmem>>) attributes {dimension_semantics = [#tpu.dimension_semantics<parallel>, #tpu.dimension_semantics<parallel>, #tpu.dimension_semantics<arbitrary>], iteration_bounds = array<i64: 2, 2, 2>, scalar_prefetch = 0 : i64, scratch_operands = 1 : i64, tpu.core_type = #tpu.core_type<tc>, window_params = [{pipeline_mode = #tpu.pipeline_mode<synchronous>, transform_indices = @transform_0, window_bounds = array<i64: 8, 128>}, {transform_indices = @transform_1, window_bounds = array<i64: 1, 128, 1>}, {transform_indices = @transform_2, window_bounds = array<i64: 1, 128, 32>}, {transform_indices = @transform_3, window_bounds = array<i64: 1, 1, 32, 32>}, {transform_indices = @transform_4, window_bounds = array<i64: 1, 8, 128>}]} {
    %c0_i32 = arith.constant 0 : i32
    %0 = arith.cmpi eq, %arg2, %c0_i32 : i32
    %1 = arith.extui %0 : i1 to i32
    %c0_i32_0 = arith.constant 0 : i32
    %2 = arith.cmpi ne, %1, %c0_i32_0 : i32
    scf.if %2 {
      %cst_21 = arith.constant 0.000000e+00 : f32
      %50 = vector.broadcast %cst_21 : f32 to vector<128x128xf32>
      %c0_22 = arith.constant 0 : index
      %c0_23 = arith.constant 0 : index
      %51 = vector.load %arg8[%c0_22, %c0_23] : memref<128x128xf32, #tpu.memory_space<vmem>>, vector<128x128xf32>
      tpu.vector_store %arg8[%c0_22, %c0_23], %50 {strides = array<i32>} : memref<128x128xf32, #tpu.memory_space<vmem>>, vector<128x128xf32>,
    } else {
    }
    %c0 = arith.constant 0 : index
    %c0_1 = arith.constant 0 : index
    %c0_2 = arith.constant 0 : index
    %3 = vector.load %arg5[%c0, %c0_1, %c0_2] : memref<1x128x32xbf16, #tpu.memory_space<vmem>>, vector<1x128x32xbf16>
    %4 = vector.shape_cast %3 : vector<1x128x32xbf16> to vector<128x32xbf16>
    %c0_3 = arith.constant 0 : index
    %c0_4 = arith.constant 0 : index
    %c0_5 = arith.constant 0 : index
    %c0_6 = arith.constant 0 : index
    %5 = vector.load %arg6[%c0_3, %c0_4, %c0_5, %c0_6] : memref<1x1x32x32xbf16, #tpu.memory_space<vmem>>, vector<1x1x32x32xbf16>
    %6 = vector.shape_cast %5 : vector<1x1x32x32xbf16> to vector<32x32xbf16>
    %cst = arith.constant dense<0.000000e+00> : vector<128x32xf32>
    %7 = tpu.matmul %4, %6, %cst {dimension_numbers = #tpu.dot_dimension_numbers<[1], [0], [0], [1], [0, 0, 1, 1], [], []>} : vector<128x32xbf16>, vector<32x32xbf16>, vector<128x32xf32> -> vector<128x32xf32>
    %8 = tpu.iota {dimensions = array<i32: 1>} : vector<128x32xi32>
    %cst_7 = arith.constant 0.000000e+00 : f32
    %9 = vector.broadcast %cst_7 : f32 to vector<128x1xf32>
    %cst_8 = arith.constant dense<0xFF800000> : vector<128xf32>
    %10 = vector.multi_reduction <maximumf>, %7, %cst_8 [1] : vector<128x32xf32> to vector<128xf32>
    %11 = vector.shape_cast %10 : vector<128xf32> to vector<128x1xf32>
    %12 = arith.addf %9, %11 : vector<128x1xf32>
    %13 = vector.broadcast %11 : vector<128x1xf32> to vector<128x32xf32>
    %14 = arith.cmpf oeq, %7, %13 : vector<128x32xf32>
    %c32_i32 = arith.constant 32 : i32
    %15 = vector.broadcast %c32_i32 : i32 to vector<128x32xi32>
    %16 = arith.select %14, %8, %15 : vector<128x32xi1>, vector<128x32xi32>
    %cst_9 = arith.constant dense<2147483647> : vector<128xi32>
    %17 = vector.multi_reduction <minsi>, %16, %cst_9 [1] : vector<128x32xi32> to vector<128xi32>
    %18 = vector.shape_cast %17 : vector<128xi32> to vector<128x1xi32>
    %19 = vector.broadcast %18 : vector<128x1xi32> to vector<128x32xi32>
    %20 = arith.cmpi eq, %8, %19 : vector<128x32xi32>
    %cst_10 = arith.constant 0xFF800000 : f32
    %21 = vector.broadcast %cst_10 : f32 to vector<128x32xf32>
    %22 = arith.select %20, %21, %7 : vector<128x32xi1>, vector<128x32xf32>
    %cst_11 = arith.constant dense<0xFF800000> : vector<128xf32>
    %23 = vector.multi_reduction <maximumf>, %22, %cst_11 [1] : vector<128x32xf32> to vector<128xf32>
    %24 = vector.shape_cast %23 : vector<128xf32> to vector<128x1xf32>
    %25 = arith.addf %12, %24 : vector<128x1xf32>
    %26 = vector.broadcast %24 : vector<128x1xf32> to vector<128x32xf32>
    %27 = arith.cmpf oeq, %22, %26 : vector<128x32xf32>
    %c32_i32_12 = arith.constant 32 : i32
    %28 = vector.broadcast %c32_i32_12 : i32 to vector<128x32xi32>
    %29 = arith.select %27, %8, %28 : vector<128x32xi1>, vector<128x32xi32>
    %cst_13 = arith.constant dense<2147483647> : vector<128xi32>
    %30 = vector.multi_reduction <minsi>, %29, %cst_13 [1] : vector<128x32xi32> to vector<128xi32>
    %31 = vector.shape_cast %30 : vector<128xi32> to vector<128x1xi32>
    %32 = vector.broadcast %31 : vector<128x1xi32> to vector<128x32xi32>
    %33 = arith.cmpi eq, %8, %32 : vector<128x32xi32>
    %cst_14 = arith.constant 0xFF800000 : f32
    %34 = vector.broadcast %cst_14 : f32 to vector<128x32xf32>
    %35 = arith.select %33, %34, %22 : vector<128x32xi1>, vector<128x32xf32>
    %cst_15 = arith.constant dense<0xFF800000> : vector<128xf32>
    %36 = vector.multi_reduction <maximumf>, %35, %cst_15 [1] : vector<128x32xf32> to vector<128xf32>
    %37 = vector.shape_cast %36 : vector<128xf32> to vector<128x1xf32>
    %38 = arith.addf %25, %37 : vector<128x1xf32>
    %39 = tpu.iota {dimensions = array<i32: 1>} : vector<128x128xi32>
    %40 = vector.broadcast %arg2 : i32 to vector<128x128xi32>
    %41 = arith.cmpi eq, %39, %40 : vector<128x128xi32>
    %c0_16 = arith.constant 0 : index
    %c0_17 = arith.constant 0 : index
    %42 = vector.load %arg8[%c0_16, %c0_17] : memref<128x128xf32, #tpu.memory_space<vmem>>, vector<128x128xf32>
    %43 = vector.shape_cast %38 : vector<128x1xf32> to vector<128x1xf32>
    %44 = vector.broadcast %43 : vector<128x1xf32> to vector<128x128xf32>
    %45 = arith.select %41, %44, %42 : vector<128x128xi1>, vector<128x128xf32>
    %c0_18 = arith.constant 0 : index
    %c0_19 = arith.constant 0 : index
    %46 = vector.load %arg8[%c0_18, %c0_19] : memref<128x128xf32, #tpu.memory_space<vmem>>, vector<128x128xf32>
    tpu.vector_store %arg8[%c0_18, %c0_19], %45 {strides = array<i32>} : memref<128x128xf32, #tpu.memory_space<vmem>>, vector<128x128xf32>,
    %c1_i32 = arith.constant 1 : i32
    %47 = arith.cmpi eq, %arg2, %c1_i32 : i32
    %48 = arith.extui %47 : i1 to i32
    %c0_i32_20 = arith.constant 0 : i32
    %49 = arith.cmpi ne, %48, %c0_i32_20 : i32
    scf.if %49 {
      %c0_21 = arith.constant 0 : index
      %c0_22 = arith.constant 0 : index
      %50 = vector.load %arg8[%c0_21, %c0_22] : memref<128x128xf32, #tpu.memory_space<vmem>>, vector<128x128xf32>
      %c0_23 = arith.constant 0 : index
      %c0_24 = arith.constant 0 : index
      %c0_25 = arith.constant 0 : index
      %51 = vector.load %arg4[%c0_23, %c0_24, %c0_25] : memref<1x128x1xf32, #tpu.memory_space<vmem>>, vector<1x128x1xf32>
      %52 = vector.shape_cast %51 : vector<1x128x1xf32> to vector<128x1xf32>
      %53 = vector.broadcast %52 : vector<128x1xf32> to vector<128x128xf32>
      %54 = arith.mulf %50, %53 : vector<128x128xf32>
      %c0_26 = arith.constant 0 : index
      %c0_27 = arith.constant 0 : index
      %55 = vector.load %arg3[%c0_26, %c0_27] : memref<8x128xf32, #tpu.memory_space<vmem>>, vector<8x128xf32>
      %cst_28 = arith.constant dense<0.000000e+00> : vector<8x128xf32>
      %56 = tpu.matmul %55, %54, %cst_28 {dimension_numbers = #tpu.dot_dimension_numbers<[1], [0], [0], [1], [0, 0, 1, 1], [], []>} : vector<8x128xf32>, vector<128x128xf32>, vector<8x128xf32> -> vector<8x128xf32>
      %c0_29 = arith.constant 0 : index
      %c0_30 = arith.constant 0 : index
      %c0_31 = arith.constant 0 : index
      %57 = vector.load %arg7[%c0_29, %c0_30, %c0_31] : memref<1x8x128xf32, #tpu.memory_space<vmem>>, vector<1x8x128xf32>
      %58 = vector.shape_cast %57 : vector<1x8x128xf32> to vector<8x128xf32>
      %59 = vector.shape_cast %56 : vector<8x128xf32> to vector<1x8x128xf32>
      tpu.vector_store %arg7[%c0_29, %c0_30, %c0_31], %59 {strides = array<i32>} : memref<1x8x128xf32, #tpu.memory_space<vmem>>, vector<1x8x128xf32>,
    } else {
    }
    return
  }
  func.func @transform_0(%arg0: i32, %arg1: i32, %arg2: i32) -> (i32, i32) {
    %c0_i32 = arith.constant 0 : i32
    %c0_i32_0 = arith.constant 0 : i32
    %c0_i32_1 = arith.constant 0 : i32
    return %c0_i32, %c0_i32_0 : i32, i32
  }
  func.func @transform_1(%arg0: i32, %arg1: i32, %arg2: i32) -> (i32, i32, i32) {
    %c0_i32 = arith.constant 0 : i32
    %c0_i32_0 = arith.constant 0 : i32
    return %arg0, %arg1, %c0_i32 : i32, i32, i32
  }
  func.func @transform_2(%arg0: i32, %arg1: i32, %arg2: i32) -> (i32, i32, i32) {
    %c0_i32 = arith.constant 0 : i32
    %c0_i32_0 = arith.constant 0 : i32
    return %arg0, %arg1, %c0_i32 : i32, i32, i32
  }
  func.func @transform_3(%arg0: i32, %arg1: i32, %arg2: i32) -> (i32, i32, i32, i32) {
    %c0_i32 = arith.constant 0 : i32
    %c0_i32_0 = arith.constant 0 : i32
    %c0_i32_1 = arith.constant 0 : i32
    return %arg0, %arg2, %c0_i32, %c0_i32_0 : i32, i32, i32, i32
  }
  func.func @transform_4(%arg0: i32, %arg1: i32, %arg2: i32) -> (i32, i32, i32) {
    %c0_i32 = arith.constant 0 : i32
    %c0_i32_0 = arith.constant 0 : i32
    return %arg0, %arg1, %c0_i32 : i32, i32, i32
  }
}

</mosaic_0001>

<llo_original>
// kernel: tpu_custom_call.1
$region0: #{tpu_custom_call.1}
  #allocation0 [shape = 'u32[]', space=smem, size = 0x4, offset = 0x4, fixed_abs, tag = 'smem constant byte address 0x4 - core index']
  #allocation1 [shape = 'u32[144,128]{1,0:T(1,128)}', space=vmem, size = 0x12000, scoped, tag = 'internal scratch']
  #allocation2 [shape = 'f32[128,128]{1,0:T(8,128)}', space=vmem, size = 0x10000, scoped, tag = 'scratch operand']
  %s0 = inlined_call_operand.vmem [shape: f32[8,128], index: 0, kind: input, shape index: {}]
  %s1 = inlined_call_operand.vmem [shape: f32[2,256,1], index: 1, kind: input, shape index: {}]
  %s2 = inlined_call_operand.vmem [shape: bf16[2,256,32], index: 2, kind: input, shape index: {}]
  %s3 = inlined_call_operand.vmem [shape: bf16[2,2,32,32], index: 3, kind: input, shape index: {}]
  %s4 = inlined_call_operand.hbm [shape: f32[2,16,128], index: 4, kind: output, shape index: {}]
  %s5 = sld [smem:[#allocation0]]
  $region57: #{tpu_custom_call.1} parent=0
    _
  %s7 = ssub.s32 1, %s5
  %s8 = scalar_select 0, %s7, %s5
  $region1: #{tpu_custom_call.1} parent=0
    #allocation3 [shape = 'u8[8192]{0}', space=vmem, size = 0x2000, scoped, tag = 'output window, operand 0']
    #allocation4 [shape = 's32[2]{0}', space=sflag, size = 0x8, scoped, tag = 'scoped memory for tpu_custom_call.1']
    %9 = vsyncpa [#allocation4], 0
    %s10 = scalar_lea.sflag [#allocation4], 1
    %11 = vsyncpa %s10, 0
    loop: start=0, step=1, limit=10
    $region2: #{tpu_custom_call.1} parent=1 // loop_pre_header
      _
    $region3: #{tpu_custom_call.1} parent=1 // loop_header
      %s13 = sphi 0, %s17
      %p14 = scmp.ge.s32.totalorder %s13, 10
      %s20 = sphi 0, %s39
      %s21 = sphi 0, %s35
      %s22 = sphi 0, %s31
      %s23 = sphi 0, %s20
      %s24 = sphi 0, %s21
      %s25 = sphi 0, %s22
      %s26 = sphi 0, %s23
      %s27 = sphi 0, %s24
      %s28 = sphi 0, %s25
      %s40 = sphi 0, %s40
      %s42 = sphi 0, %s40
      %s43 = sphi 0, %s42
      %s57 = sphi 0, %s43
      %s65 = sphi 0, %s67
      %s68 = sphi 0, %s65
      %s69 = sphi 0, %s68
      %s85 = sphi 0, %s69
      %s93 = sphi 0, %s95
      %s96 = sphi 0, %s93
      %s97 = sphi 0, %s96
      %s113 = sphi 0, %s97
      %s121 = sphi 0, %s123
      %s124 = sphi 0, %s121
      %s125 = sphi 0, %s124
      %s141 = sphi 0, %s125
      %s149 = sphi 0, %s151
      %s152 = sphi 0, %s149
      %s153 = sphi 0, %s152
      %s169 = sphi 0, %s153
    $region4: #{tpu_custom_call.1} parent=1 // loop_header_branch
      %16 = sbr.rel (%p14) target = $region8
    $region5: #{tpu_custom_call.1} parent=1 // loop_body
      %s18 = ssub.s32 %s13, 1
      %s19 = ssub.s32 %s13, 2
      %s29 = sadd.s32 1, %s22
      %p30 = scmp.ge.s32.totalorder %s29, 2
      %s31 = scalar_select %p30, 0, %s29
      %s32 = sadd.s32 1, %s21
      %s33 = scalar_select %p30, %s32, %s21
      %p34 = scmp.ge.s32.totalorder %s33, 2
      %s35 = scalar_select %p34, 0, %s33
      %s36 = sadd.s32 1, %s20
      %s37 = scalar_select %p34, %s36, %s20
      %p38 = scmp.ge.s32.totalorder %s37, 2
      %s39 = scalar_select %p38, 0, %s37
      %s41 = sadd.s32 %s40, 1
      %p44 = scmp.eq.s32.totalorder %s13, 7
      %p45 = scmp.ne.s32.totalorder %s40, %s42
      %p46 = scmp.eq.s32.totalorder %s13, 0
      %p47 = por %p45, %p46
      %p48 = scmp.ne.s32.totalorder %s40, %s42
      %p49 = scmp.eq.s32.totalorder %s18, 7
      %p50 = por %p48, %p49
      %p51 = scmp.ne.s32.totalorder %s42, %s43
      %p52 = scmp.eq.s32.totalorder %s18, 0
      %p53 = por %p51, %p52
      %p54 = scmp.ne.s32.totalorder %s42, %s43
      %p55 = scmp.eq.s32.totalorder %s19, 7
      %p56 = por %p54, %p55
      %p58 = scmp.ne.s32.totalorder %s43, %s57
      %p59 = scmp.eq.s32.totalorder %s19, 0
      %p60 = por %p58, %p59
      %s61 = ssub.s32 %s20, %s39
      %s62 = ssub.s32 %s21, %s35
      %s63 = sor.u32 %s61, %s62
      %p64 = scmp.eq.s32.totalorder %s63, 0
      %s66 = sadd.s32 %s65, 1
      %s67 = scalar_select %p64, %s65, %s66
      %p70 = pneg %p64
      %p71 = scmp.eq.s32.totalorder %s13, 7
      %p72 = por %p70, %p71
      %p73 = scmp.ne.s32.totalorder %s65, %s68
      %p74 = scmp.eq.s32.totalorder %s13, 0
      %p75 = por %p73, %p74
      %p76 = scmp.ne.s32.totalorder %s65, %s68
      %p77 = scmp.eq.s32.totalorder %s18, 7
      %p78 = por %p76, %p77
      %p79 = scmp.ne.s32.totalorder %s68, %s69
      %p80 = scmp.eq.s32.totalorder %s18, 0
      %p81 = por %p79, %p80
      %p82 = scmp.ne.s32.totalorder %s68, %s69
      %p83 = scmp.eq.s32.totalorder %s19, 7
      %p84 = por %p82, %p83
      %p86 = scmp.ne.s32.totalorder %s69, %s85
      %p87 = scmp.eq.s32.totalorder %s19, 0
      %p88 = por %p86, %p87
      %s89 = ssub.s32 %s20, %s39
      %s90 = ssub.s32 %s21, %s35
      %s91 = sor.u32 %s89, %s90
      %p92 = scmp.eq.s32.totalorder %s91, 0
      %s94 = sadd.s32 %s93, 1
      %s95 = scalar_select %p92, %s93, %s94
      %p98 = pneg %p92
      %p99 = scmp.eq.s32.totalorder %s13, 7
      %p100 = por %p98, %p99
      %p101 = scmp.ne.s32.totalorder %s93, %s96
      %p102 = scmp.eq.s32.totalorder %s13, 0
      %p103 = por %p101, %p102
      %p104 = scmp.ne.s32.totalorder %s93, %s96
      %p105 = scmp.eq.s32.totalorder %s18, 7
      %p106 = por %p104, %p105
      %p107 = scmp.ne.s32.totalorder %s96, %s97
      %p108 = scmp.eq.s32.totalorder %s18, 0
      %p109 = por %p107, %p108
      %p110 = scmp.ne.s32.totalorder %s96, %s97
      %p111 = scmp.eq.s32.totalorder %s19, 7
      %p112 = por %p110, %p111
      %p114 = scmp.ne.s32.totalorder %s97, %s113
      %p115 = scmp.eq.s32.totalorder %s19, 0
      %p116 = por %p114, %p115
      %s117 = ssub.s32 %s20, %s39
      %s118 = ssub.s32 %s22, %s31
      %s119 = sor.u32 %s117, %s118
      %p120 = scmp.eq.s32.totalorder %s119, 0
      %s122 = sadd.s32 %s121, 1
      %s123 = scalar_select %p120, %s121, %s122
      %p126 = pneg %p120
      %p127 = scmp.eq.s32.totalorder %s13, 7
      %p128 = por %p126, %p127
      %p129 = scmp.ne.s32.totalorder %s121, %s124
      %p130 = scmp.eq.s32.totalorder %s13, 0
      %p131 = por %p129, %p130
      %p132 = scmp.ne.s32.totalorder %s121, %s124
      %p133 = scmp.eq.s32.totalorder %s18, 7
      %p134 = por %p132, %p133
      %p135 = scmp.ne.s32.totalorder %s124, %s125
      %p136 = scmp.eq.s32.totalorder %s18, 0
      %p137 = por %p135, %p136
      %p138 = scmp.ne.s32.totalorder %s124, %s125
      %p139 = scmp.eq.s32.totalorder %s19, 7
      %p140 = por %p138, %p139
      %p142 = scmp.ne.s32.totalorder %s125, %s141
      %p143 = scmp.eq.s32.totalorder %s19, 0
      %p144 = por %p142, %p143
      %s145 = ssub.s32 %s20, %s39
      %s146 = ssub.s32 %s21, %s35
      %s147 = sor.u32 %s145, %s146
      %p148 = scmp.eq.s32.totalorder %s147, 0
      %s150 = sadd.s32 %s149, 1
      %s151 = scalar_select %p148, %s149, %s150
      %p154 = pneg %p148
      %p155 = scmp.eq.s32.totalorder %s13, 7
      %p156 = por %p154, %p155
      %p157 = scmp.ne.s32.totalorder %s149, %s152
      %p158 = scmp.eq.s32.totalorder %s13, 0
      %p159 = por %p157, %p158
      %p160 = scmp.ne.s32.totalorder %s149, %s152
      %p161 = scmp.eq.s32.totalorder %s18, 7
      %p162 = por %p160, %p161
      %p163 = scmp.ne.s32.totalorder %s152, %s153
      %p164 = scmp.eq.s32.totalorder %s18, 0
      %p165 = por %p163, %p164
      %p166 = scmp.ne.s32.totalorder %s152, %s153
      %p167 = scmp.eq.s32.totalorder %s19, 7
      %p168 = por %p166, %p167
      %p170 = scmp.ne.s32.totalorder %s153, %s169
      %p171 = scmp.eq.s32.totalorder %s19, 0
      %p172 = por %p170, %p171
      %p173 = scmp.le.s32.totalorder 1, %s13
      %p174 = scmp.lt.s32.totalorder %s13, 9
      %p175 = pnand %p173, %p174
      %p176 = pneg %p175
      // Predicated region
      $region9: #{tpu_custom_call.1} parent=5 // pred_check
        _
      $region10: #{tpu_custom_call.1} parent=5 // pred_check_branch
        %178 = sbr.rel (%p175) target = $region12
      $region11: #{tpu_custom_call.1} parent=5 // pred_region
        %s179 = ssub.s32 %s13, 1
        // Predicated region
        $region13: #{tpu_custom_call.1} parent=11 // pred_check
          %p180 = pneg %p53
        $region14: #{tpu_custom_call.1} parent=11 // pred_check_branch
          %182 = sbr.rel (%p180) target = $region16
        $region15: #{tpu_custom_call.1} parent=11 // pred_region
          _
        $region16: #{tpu_custom_call.1} parent=11 // pred_fallthru
          _
      $region12: #{tpu_custom_call.1} parent=5 // pred_fallthru
        _
      %p183 = scmp.lt.s32.totalorder %s13, 8
      // Predicated region
      $region17: #{tpu_custom_call.1} parent=5 // pred_check
        %p184 = pneg %p183
      $region18: #{tpu_custom_call.1} parent=5 // pred_check_branch
        %186 = sbr.rel (%p184) target = $region20
      $region19: #{tpu_custom_call.1} parent=5 // pred_region
        // Predicated region
        $region21: #{tpu_custom_call.1} parent=19 // pred_check
          %p187 = pneg %p75
        $region22: #{tpu_custom_call.1} parent=19 // pred_check_branch
          %189 = sbr.rel (%p187) target = $region24
        $region23: #{tpu_custom_call.1} parent=19 // pred_region
          %s190 = smul.u32 16, %s21
          %p191 = scmp.lt.s32.totalorder %s20, 1
          %s192 = scalar_select %p191, %s20, 1
          %p193 = scmp.lt.s32.totalorder %s190, 31
          %s194 = scalar_select %p193, %s190, 31
          %s195 = smul.addr %s192, 32
          %s196 = sadd.s32 %s194, %s195
          %s197 = smul.addr %s196, 8
          %s198 = scalar_lea.vmem %s1, %s197
          %s199 = smul.u32 16, %s21
        $region24: #{tpu_custom_call.1} parent=19 // pred_fallthru
          _
        // Predicated region
        $region25: #{tpu_custom_call.1} parent=19 // pred_check
          %p200 = pneg %p103
        $region26: #{tpu_custom_call.1} parent=19 // pred_check_branch
          %202 = sbr.rel (%p200) target = $region28
        $region27: #{tpu_custom_call.1} parent=19 // pred_region
          %s203 = smul.u32 16, %s21
          %p204 = scmp.lt.s32.totalorder %s20, 1
          %s205 = scalar_select %p204, %s20, 1
          %p206 = scmp.lt.s32.totalorder %s203, 31
          %s207 = scalar_select %p206, %s203, 31
          %s208 = smul.addr %s205, 32
          %s209 = sadd.s32 %s207, %s208
          %s210 = smul.addr %s209, 4
          %s211 = scalar_lea.vmem %s2, %s210
          %s212 = smul.u32 16, %s21
        $region28: #{tpu_custom_call.1} parent=19 // pred_fallthru
          _
        // Predicated region
        $region29: #{tpu_custom_call.1} parent=19 // pred_check
          %p213 = pneg %p131
        $region30: #{tpu_custom_call.1} parent=19 // pred_check_branch
          %215 = sbr.rel (%p213) target = $region32
        $region31: #{tpu_custom_call.1} parent=19 // pred_region
          %p216 = scmp.lt.s32.totalorder %s20, 1
          %s217 = scalar_select %p216, %s20, 1
          %p218 = scmp.lt.s32.totalorder %s22, 1
          %s219 = scalar_select %p218, %s22, 1
          %s220 = smul.addr %s219, 4
          %s221 = smul.addr %s217, 8
          %s222 = sadd.s32 %s220, %s221
          %s223 = smul.addr %s222, 4
          %s224 = scalar_lea.vmem %s3, %s223
        $region32: #{tpu_custom_call.1} parent=19 // pred_fallthru
          _
      $region20: #{tpu_custom_call.1} parent=5 // pred_fallthru
        _
      %p225 = scmp.le.s32.totalorder 1, %s13
      %p226 = scmp.lt.s32.totalorder %s13, 9
      %p227 = pnand %p225, %p226
      %p228 = pneg %p227
      // Predicated region
      $region33: #{tpu_custom_call.1} parent=5 // pred_check
        _
      $region34: #{tpu_custom_call.1} parent=5 // pred_check_branch
        %230 = sbr.rel (%p227) target = $region36
      $region35: #{tpu_custom_call.1} parent=5 // pred_region
        %s231 = ssub.s32 %s13, 1
        %p232 = pneg %p53
        %p233 = pneg %p50
        %s234 = smul.u32 16, %s24
        %p235 = scmp.lt.s32.totalorder %s23, 1
        %s236 = scalar_select %p235, %s23, 1
        %p237 = scmp.lt.s32.totalorder %s234, 31
        %s238 = scalar_select %p237, %s234, 31
        %s239 = smul.addr %s236, 32
        %s240 = sadd.s32 %s238, %s239
        %s241 = smul.addr %s240, 8
        %s242 = scalar_lea.vmem %s1, %s241
        %p243 = pneg %p81
        %p244 = pneg %p78
        %s245 = smul.u32 16, %s24
        %p246 = scmp.lt.s32.totalorder %s23, 1
        %s247 = scalar_select %p246, %s23, 1
        %p248 = scmp.lt.s32.totalorder %s245, 31
        %s249 = scalar_select %p248, %s245, 31
        %s250 = smul.addr %s247, 32
        %s251 = sadd.s32 %s249, %s250
        %s252 = smul.addr %s251, 4
        %s253 = scalar_lea.vmem %s2, %s252
        %p254 = pneg %p109
        %p255 = pneg %p106
        %p256 = scmp.lt.s32.totalorder %s23, 1
        %s257 = scalar_select %p256, %s23, 1
        %p258 = scmp.lt.s32.totalorder %s25, 1
        %s259 = scalar_select %p258, %s25, 1
        %s260 = smul.addr %s259, 4
        %s261 = smul.addr %s257, 8
        %s262 = sadd.s32 %s260, %s261
        %s263 = smul.addr %s262, 4
        %s264 = scalar_lea.vmem %s3, %s263
        %p265 = pneg %p137
        %p266 = pneg %p134
        %p267 = pneg %p165
        %p268 = pneg %p162
        %s269 = sand.u32 %s152, 1
        %s270 = scalar_lea.sflag [#allocation4], %s269
        %s271 = sand.u32 %s152, 1
        %s272 = smul.addr %s271, 8
        %s273 = scalar_lea.vmem [#allocation3], %s272
        %s274 = smul.u32 16, %s24
        %p275 = scmp.lt.s32.totalorder %s23, 1
        %s276 = scalar_select %p275, %s23, 1
        %p277 = scmp.lt.s32.totalorder %s274, 31
        %s278 = scalar_select %p277, %s274, 31
        %s279 = smul.addr %s276, 32
        %s280 = sadd.s32 %s278, %s279
        %s281 = smul.addr %s280, 8
        %s282 = scalar_lea.vmem %s1, %s281
        %s283 = smul.u32 16, %s24
        %s284 = smul.u32 16, %s24
        %p285 = scmp.lt.s32.totalorder %s23, 1
        %s286 = scalar_select %p285, %s23, 1
        %p287 = scmp.lt.s32.totalorder %s284, 31
        %s288 = scalar_select %p287, %s284, 31
        %s289 = smul.addr %s286, 32
        %s290 = sadd.s32 %s288, %s289
        %s291 = smul.addr %s290, 4
        %s292 = scalar_lea.vmem %s2, %s291
        %s293 = smul.u32 16, %s24
        %p294 = scmp.lt.s32.totalorder %s23, 1
        %s295 = scalar_select %p294, %s23, 1
        %p296 = scmp.lt.s32.totalorder %s25, 1
        %s297 = scalar_select %p296, %s25, 1
        %s298 = smul.addr %s297, 4
        %s299 = smul.addr %s295, 8
        %s300 = sadd.s32 %s298, %s299
        %s301 = smul.addr %s300, 4
        %s302 = scalar_lea.vmem %s3, %s301
        %p304 = scmp.eq.s32.totalorder %s25, 0
        // Predicated region
        $region37: #{tpu_custom_call.1} parent=35 // pred_check
          %p305 = pneg %p304
        $region38: #{tpu_custom_call.1} parent=35 // pred_check_branch
          %307 = sbr.rel (%p305) target = $region40
        $region39: #{tpu_custom_call.1} parent=35 // pred_region
          %308 = vst [vmem:[#allocation2] sm:$0xff] 0.0
          %309 = vst [vmem:[#allocation2 + $0x8] sm:$0xff] 0.0
          %310 = vst [vmem:[#allocation2 + $0x10] sm:$0xff] 0.0
          %311 = vst [vmem:[#allocation2 + $0x18] sm:$0xff] 0.0
          %312 = vst [vmem:[#allocation2 + $0x20] sm:$0xff] 0.0
          %313 = vst [vmem:[#allocation2 + $0x28] sm:$0xff] 0.0
          %314 = vst [vmem:[#allocation2 + $0x30] sm:$0xff] 0.0
          %315 = vst [vmem:[#allocation2 + $0x38] sm:$0xff] 0.0
          %316 = vst [vmem:[#allocation2 + $0x40] sm:$0xff] 0.0
          %317 = vst [vmem:[#allocation2 + $0x48] sm:$0xff] 0.0
          %318 = vst [vmem:[#allocation2 + $0x50] sm:$0xff] 0.0
          %319 = vst [vmem:[#allocation2 + $0x58] sm:$0xff] 0.0
          %320 = vst [vmem:[#allocation2 + $0x60] sm:$0xff] 0.0
          %321 = vst [vmem:[#allocation2 + $0x68] sm:$0xff] 0.0
          %322 = vst [vmem:[#allocation2 + $0x70] sm:$0xff] 0.0
          %323 = vst [vmem:[#allocation2 + $0x78] sm:$0xff] 0.0
        $region40: #{tpu_custom_call.1} parent=35 // pred_fallthru
          _
        %v324 = vld [vmem:[%s292] sm:$0xf]
        %v325 = vld [vmem:[%s292 + $0x4] sm:$0xf]
        %v326 = vld [vmem:[%s292 + $0x8] sm:$0xf]
        %v327 = vld [vmem:[%s292 + $0xc] sm:$0xf]
        %v328 = vld [vmem:[%s292 + $0x10] sm:$0xf]
        %v329 = vld [vmem:[%s292 + $0x14] sm:$0xf]
        %v330 = vld [vmem:[%s292 + $0x18] sm:$0xf]
        %v331 = vld [vmem:[%s292 + $0x1c] sm:$0xf]
        %v332 = vld [vmem:[%s292 + $0x20] sm:$0xf]
        %v333 = vld [vmem:[%s292 + $0x24] sm:$0xf]
        %v334 = vld [vmem:[%s292 + $0x28] sm:$0xf]
        %v335 = vld [vmem:[%s292 + $0x2c] sm:$0xf]
        %v336 = vld [vmem:[%s292 + $0x30] sm:$0xf]
        %v337 = vld [vmem:[%s292 + $0x34] sm:$0xf]
        %v338 = vld [vmem:[%s292 + $0x38] sm:$0xf]
        %v339 = vld [vmem:[%s292 + $0x3c] sm:$0xf]
        %v340 = vld [vmem:[%s302] sm:$0xf]
        %v341 = vld [vmem:[%s302 + $0x4] sm:$0xf]
        %v342 = vld [vmem:[%s302 + $0x8] sm:$0xf]
        %v343 = vld [vmem:[%s302 + $0xc] sm:$0xf]
        %v360 = vunpack.c.l.b16 %v324
        %v361 = vunpack.c.l.b16 %v325
        %v362 = vunpack.c.l.b16 %v326
        %v363 = vunpack.c.l.b16 %v327
        %v364 = vunpack.c.l.b16 %v328
        %v365 = vunpack.c.l.b16 %v329
        %v366 = vunpack.c.l.b16 %v330
        %v367 = vunpack.c.l.b16 %v331
        %v368 = vunpack.c.l.b16 %v332
        %v369 = vunpack.c.l.b16 %v333
        %v370 = vunpack.c.l.b16 %v334
        %v371 = vunpack.c.l.b16 %v335
        %v372 = vunpack.c.l.b16 %v336
        %v373 = vunpack.c.l.b16 %v337
        %v374 = vunpack.c.l.b16 %v338
        %v375 = vunpack.c.l.b16 %v339
        %v376 = vpack.c.b16 %v361, %v360
        %v377 = vpack.c.b16 %v363, %v362
        %v378 = vpack.c.b16 %v365, %v364
        %v379 = vpack.c.b16 %v367, %v366
        %v380 = vpack.c.b16 %v369, %v368
        %v381 = vpack.c.b16 %v371, %v370
        %v382 = vpack.c.b16 %v373, %v372
        %v383 = vpack.c.b16 %v375, %v374
        %v388 = vunpack.c.l.b16 %v340
        %v389 = vunpack.c.l.b16 %v341
        %v390 = vunpack.c.l.b16 %v342
        %v391 = vunpack.c.l.b16 %v343
        %v392 = vpack.c.b16 %v389, %v388
        %v393 = vpack.c.b16 %v391, %v390
        %vm396 = vcmask 261120
        %v398 = vsel %vm396, %v376, 0
        %v401 = vsel %vm396, %v377, 0
        %v404 = vsel %vm396, %v378, 0
        %v407 = vsel %vm396, %v379, 0
        %v410 = vsel %vm396, %v380, 0
        %v413 = vsel %vm396, %v381, 0
        %v416 = vsel %vm396, %v382, 0
        %v419 = vsel %vm396, %v383, 0
        %421 = vmatprep.subr.bf16.mxu0 0
        %422 = vmatpush1.bf16.msra.mxu0 %v392
        %423 = vmatprep.subr.bf16.mxu0 0
        %424 = vmatpush1.bf16.msra.mxu0 %v393
        %425 = vmatprep.subr.bf16.mxu0 0
        %426 = vmatpush1.bf16.msra.mxu0 0
        %427 = vmatprep.subr.bf16.mxu0 0
        %428 = vmatpush1.bf16.msra.mxu0 0
        %429 = vmatprep.subr.bf16.mxu0 0
        %430 = vmatpush1.bf16.msra.mxu0 0
        %431 = vmatprep.subr.bf16.mxu0 0
        %432 = vmatpush1.bf16.msra.mxu0 0
        %433 = vmatprep.subr.bf16.mxu0 0
        %434 = vmatpush1.bf16.msra.mxu0 0
        %435 = vmatprep.subr.bf16.mxu0 0
        %436 = vmatpush1.bf16.msra.mxu0 0
        %437 = vmatprep.subr.bf16.mxu0 0
        %438 = vmatpush1.bf16.msra.mxu0 0
        %439 = vmatprep.subr.bf16.mxu0 0
        %440 = vmatpush1.bf16.msra.mxu0 0
        %441 = vmatprep.subr.bf16.mxu0 0
        %442 = vmatpush1.bf16.msra.mxu0 0
        %443 = vmatprep.subr.bf16.mxu0 0
        %444 = vmatpush1.bf16.msra.mxu0 0
        %445 = vmatprep.subr.bf16.mxu0 0
        %446 = vmatpush1.bf16.msra.mxu0 0
        %447 = vmatprep.subr.bf16.mxu0 0
        %448 = vmatpush1.bf16.msra.mxu0 0
        %449 = vmatprep.subr.bf16.mxu0 0
        %450 = vmatpush1.bf16.msra.mxu0 0
        %451 = vmatprep.subr.bf16.mxu0 0
        %452 = vmatpush1.bf16.msra.mxu0 0
        %453 = vmatprep.mubr.bf16.mxu0 0
        %454 = vmatmul.mubr.bf16.gmra.mrb[0].mxu0 %v398
        %v455 = vpop.f32.mrb[0].mxu0
        %v456 = vadd.f32 0.0, %v455
        %v457 = vpop.f32.mrb[0].mxu0
        %v458 = vpop.f32.mrb[0].mxu0
        %v459 = vadd.f32 0.0, %v458
        %v460 = vpop.f32.mrb[0].mxu0
        %461 = vmatprep.mubr.bf16.mxu0 0
        %462 = vmatmul.mubr.bf16.gmra.mrb[0].mxu0 %v401
        %v463 = vpop.f32.mrb[0].mxu0
        %v464 = vadd.f32 0.0, %v463
        %v465 = vpop.f32.mrb[0].mxu0
        %v466 = vpop.f32.mrb[0].mxu0
        %v467 = vadd.f32 0.0, %v466
        %v468 = vpop.f32.mrb[0].mxu0
        %469 = vmatprep.mubr.bf16.mxu0 0
        %470 = vmatmul.mubr.bf16.gmra.mrb[0].mxu0 %v404
        %v471 = vpop.f32.mrb[0].mxu0
        %v472 = vadd.f32 0.0, %v471
        %v473 = vpop.f32.mrb[0].mxu0
        %v474 = vpop.f32.mrb[0].mxu0
        %v475 = vadd.f32 0.0, %v474
        %v476 = vpop.f32.mrb[0].mxu0
        %477 = vmatprep.mubr.bf16.mxu0 0
        %478 = vmatmul.mubr.bf16.gmra.mrb[0].mxu0 %v407
        %v479 = vpop.f32.mrb[0].mxu0
        %v480 = vadd.f32 0.0, %v479
        %v481 = vpop.f32.mrb[0].mxu0
        %v482 = vpop.f32.mrb[0].mxu0
        %v483 = vadd.f32 0.0, %v482
        %v484 = vpop.f32.mrb[0].mxu0
        %485 = vmatprep.mubr.bf16.mxu0 0
        %486 = vmatmul.mubr.bf16.gmra.mrb[0].mxu0 %v410
        %v487 = vpop.f32.mrb[0].mxu0
        %v488 = vadd.f32 0.0, %v487
        %v489 = vpop.f32.mrb[0].mxu0
        %v490 = vpop.f32.mrb[0].mxu0
        %v491 = vadd.f32 0.0, %v490
        %v492 = vpop.f32.mrb[0].mxu0
        %493 = vmatprep.mubr.bf16.mxu0 0
        %494 = vmatmul.mubr.bf16.gmra.mrb[0].mxu0 %v413
        %v495 = vpop.f32.mrb[0].mxu0
        %v496 = vadd.f32 0.0, %v495
        %v497 = vpop.f32.mrb[0].mxu0
        %v498 = vpop.f32.mrb[0].mxu0
        %v499 = vadd.f32 0.0, %v498
        %v500 = vpop.f32.mrb[0].mxu0
        %501 = vmatprep.mubr.bf16.mxu0 0
        %502 = vmatmul.mubr.bf16.gmra.mrb[0].mxu0 %v416
        %v503 = vpop.f32.mrb[0].mxu0
        %v504 = vadd.f32 0.0, %v503
        %v505 = vpop.f32.mrb[0].mxu0
        %v506 = vpop.f32.mrb[0].mxu0
        %v507 = vadd.f32 0.0, %v506
        %v508 = vpop.f32.mrb[0].mxu0
        %509 = vmatprep.mubr.bf16.mxu0 0
        %510 = vmatmul.mubr.bf16.gmra.mrb[0].mxu0 %v419
        %v511 = vpop.f32.mrb[0].mxu0
        %v512 = vadd.f32 0.0, %v511
        %v513 = vpop.f32.mrb[0].mxu0
        %v514 = vpop.f32.mrb[0].mxu0
        %v515 = vadd.f32 0.0, %v514
        %v516 = vpop.f32.mrb[0].mxu0
        %517 = vdwg.mxu0
        %v518 = vlaneseq
        %v519 = vand.u32 %v518, 127
        %v520 = vsel %vm396, %v456, -inf
        %521 = vmax.xlane.f32.xlu0 %v520
        %v522 = vpop.xlane.xlu0 %521
        %v523 = vsel %vm396, %v459, -inf
        %524 = vmax.xlane.f32.xlu0 %v523
        %v525 = vpop.xlane.xlu0 %524
        %v526 = vsel %vm396, %v464, -inf
        %527 = vmax.xlane.f32.xlu0 %v526
        %v528 = vpop.xlane.xlu0 %527
        %v529 = vsel %vm396, %v467, -inf
        %530 = vmax.xlane.f32.xlu0 %v529
        %v531 = vpop.xlane.xlu0 %530
        %v532 = vsel %vm396, %v472, -inf
        %533 = vmax.xlane.f32.xlu0 %v532
        %v534 = vpop.xlane.xlu0 %533
        %v535 = vsel %vm396, %v475, -inf
        %536 = vmax.xlane.f32.xlu0 %v535
        %v537 = vpop.xlane.xlu0 %536
        %v538 = vsel %vm396, %v480, -inf
        %539 = vmax.xlane.f32.xlu0 %v538
        %v540 = vpop.xlane.xlu0 %539
        %v541 = vsel %vm396, %v483, -inf
        %542 = vmax.xlane.f32.xlu0 %v541
        %v543 = vpop.xlane.xlu0 %542
        %v544 = vsel %vm396, %v488, -inf
        %545 = vmax.xlane.f32.xlu0 %v544
        %v546 = vpop.xlane.xlu0 %545
        %v547 = vsel %vm396, %v491, -inf
        %548 = vmax.xlane.f32.xlu0 %v547
        %v549 = vpop.xlane.xlu0 %548
        %v550 = vsel %vm396, %v496, -inf
        %551 = vmax.xlane.f32.xlu0 %v550
        %v552 = vpop.xlane.xlu0 %551
        %v553 = vsel %vm396, %v499, -inf
        %554 = vmax.xlane.f32.xlu0 %v553
        %v555 = vpop.xlane.xlu0 %554
        %v556 = vsel %vm396, %v504, -inf
        %557 = vmax.xlane.f32.xlu0 %v556
        %v558 = vpop.xlane.xlu0 %557
        %v559 = vsel %vm396, %v507, -inf
        %560 = vmax.xlane.f32.xlu0 %v559
        %v561 = vpop.xlane.xlu0 %560
        %v562 = vsel %vm396, %v512, -inf
        %563 = vmax.xlane.f32.xlu0 %v562
        %v564 = vpop.xlane.xlu0 %563
        %v565 = vsel %vm396, %v515, -inf
        %566 = vmax.xlane.f32.xlu0 %v565
        %v567 = vpop.xlane.xlu0 %566
        %v568 = vadd.f32 %v522, 0.0
        %v569 = vadd.f32 %v525, 0.0
        %v570 = vadd.f32 %v528, 0.0
        %v571 = vadd.f32 %v531, 0.0
        %v572 = vadd.f32 %v534, 0.0
        %v573 = vadd.f32 %v537, 0.0
        %v574 = vadd.f32 %v540, 0.0
        %v575 = vadd.f32 %v543, 0.0
        %v576 = vadd.f32 %v546, 0.0
        %v577 = vadd.f32 %v549, 0.0
        %v578 = vadd.f32 %v552, 0.0
        %v579 = vadd.f32 %v555, 0.0
        %v580 = vadd.f32 %v558, 0.0
        %v581 = vadd.f32 %v561, 0.0
        %v582 = vadd.f32 %v564, 0.0
        %v583 = vadd.f32 %v567, 0.0
        %vm584 = vcmp.eq.f32.partialorder %v456, %v522
        %vm585 = vcmp.eq.f32.partialorder %v459, %v525
        %vm586 = vcmp.eq.f32.partialorder %v464, %v528
        %vm587 = vcmp.eq.f32.partialorder %v467, %v531
        %vm588 = vcmp.eq.f32.partialorder %v472, %v534
        %vm589 = vcmp.eq.f32.partialorder %v475, %v537
        %vm590 = vcmp.eq.f32.partialorder %v480, %v540
        %vm591 = vcmp.eq.f32.partialorder %v483, %v543
        %vm592 = vcmp.eq.f32.partialorder %v488, %v546
        %vm593 = vcmp.eq.f32.partialorder %v491, %v549
        %vm594 = vcmp.eq.f32.partialorder %v496, %v552
        %vm595 = vcmp.eq.f32.partialorder %v499, %v555
        %vm596 = vcmp.eq.f32.partialorder %v504, %v558
        %vm597 = vcmp.eq.f32.partialorder %v507, %v561
        %vm598 = vcmp.eq.f32.partialorder %v512, %v564
        %vm599 = vcmp.eq.f32.partialorder %v515, %v567
        %v600 = vsel %vm584, %v519, 32
        %v601 = vsel %vm585, %v519, 32
        %v602 = vsel %vm586, %v519, 32
        %v603 = vsel %vm587, %v519, 32
        %v604 = vsel %vm588, %v519, 32
        %v605 = vsel %vm589, %v519, 32
        %v606 = vsel %vm590, %v519, 32
        %v607 = vsel %vm591, %v519, 32
        %v608 = vsel %vm592, %v519, 32
        %v609 = vsel %vm593, %v519, 32
        %v610 = vsel %vm594, %v519, 32
        %v611 = vsel %vm595, %v519, 32
        %v612 = vsel %vm596, %v519, 32
        %v613 = vsel %vm597, %v519, 32
        %v614 = vsel %vm598, %v519, 32
        %v615 = vsel %vm599, %v519, 32
        %v616 = vsel %vm396, %v600, 2147483647
        %v617 = vand.u32 %v616, 65535
        %v618 = vshra.s32 %v616, 16
        %v619 = vcvt.s32.f32 %v617
        %v620 = vcvt.s32.f32 %v618
        %621 = vmin.xlane.f32.xlu0 %v620
        %v622 = vpop.xlane.xlu0 %621
        %vm623 = vcmp.eq.f32.partialorder %v620, %v622
        %v624 = vsel %vm623, %v619, inf
        %625 = vmin.xlane.f32.xlu0 %v624
        %v626 = vpop.xlane.xlu0 %625
        %v627 = vcvt.f32.s32 %v626
        %v628 = vcvt.f32.s32 %v622
        %v629 = vshll.u32 %v628, 16
        %v630 = vadd.s32 %v629, %v627
        %v631 = vsel %vm396, %v601, 2147483647
        %v632 = vand.u32 %v631, 65535
        %v633 = vshra.s32 %v631, 16
        %v634 = vcvt.s32.f32 %v632
        %v635 = vcvt.s32.f32 %v633
        %636 = vmin.xlane.f32.xlu0 %v635
        %v637 = vpop.xlane.xlu0 %636
        %vm638 = vcmp.eq.f32.partialorder %v635, %v637
        %v639 = vsel %vm638, %v634, inf
        %640 = vmin.xlane.f32.xlu0 %v639
        %v641 = vpop.xlane.xlu0 %640
        %v642 = vcvt.f32.s32 %v641
        %v643 = vcvt.f32.s32 %v637
        %v644 = vshll.u32 %v643, 16
        %v645 = vadd.s32 %v644, %v642
        %v646 = vsel %vm396, %v602, 2147483647
        %v647 = vand.u32 %v646, 65535
        %v648 = vshra.s32 %v646, 16
        %v649 = vcvt.s32.f32 %v647
        %v650 = vcvt.s32.f32 %v648
        %651 = vmin.xlane.f32.xlu0 %v650
        %v652 = vpop.xlane.xlu0 %651
        %vm653 = vcmp.eq.f32.partialorder %v650, %v652
        %v654 = vsel %vm653, %v649, inf
        %655 = vmin.xlane.f32.xlu0 %v654
        %v656 = vpop.xlane.xlu0 %655
        %v657 = vcvt.f32.s32 %v656
        %v658 = vcvt.f32.s32 %v652
        %v659 = vshll.u32 %v658, 16
        %v660 = vadd.s32 %v659, %v657
        %v661 = vsel %vm396, %v603, 2147483647
        %v662 = vand.u32 %v661, 65535
        %v663 = vshra.s32 %v661, 16
        %v664 = vcvt.s32.f32 %v662
        %v665 = vcvt.s32.f32 %v663
        %666 = vmin.xlane.f32.xlu0 %v665
        %v667 = vpop.xlane.xlu0 %666
        %vm668 = vcmp.eq.f32.partialorder %v665, %v667
        %v669 = vsel %vm668, %v664, inf
        %670 = vmin.xlane.f32.xlu0 %v669
        %v671 = vpop.xlane.xlu0 %670
        %v672 = vcvt.f32.s32 %v671
        %v673 = vcvt.f32.s32 %v667
        %v674 = vshll.u32 %v673, 16
        %v675 = vadd.s32 %v674, %v672
        %v676 = vsel %vm396, %v604, 2147483647
        %v677 = vand.u32 %v676, 65535
        %v678 = vshra.s32 %v676, 16
        %v679 = vcvt.s32.f32 %v677
        %v680 = vcvt.s32.f32 %v678
        %681 = vmin.xlane.f32.xlu0 %v680
        %v682 = vpop.xlane.xlu0 %681
        %vm683 = vcmp.eq.f32.partialorder %v680, %v682
        %v684 = vsel %vm683, %v679, inf
        %685 = vmin.xlane.f32.xlu0 %v684
        %v686 = vpop.xlane.xlu0 %685
        %v687 = vcvt.f32.s32 %v686
        %v688 = vcvt.f32.s32 %v682
        %v689 = vshll.u32 %v688, 16
        %v690 = vadd.s32 %v689, %v687
        %v691 = vsel %vm396, %v605, 2147483647
        %v692 = vand.u32 %v691, 65535
        %v693 = vshra.s32 %v691, 16
        %v694 = vcvt.s32.f32 %v692
        %v695 = vcvt.s32.f32 %v693
        %696 = vmin.xlane.f32.xlu0 %v695
        %v697 = vpop.xlane.xlu0 %696
        %vm698 = vcmp.eq.f32.partialorder %v695, %v697
        %v699 = vsel %vm698, %v694, inf
        %700 = vmin.xlane.f32.xlu0 %v699
        %v701 = vpop.xlane.xlu0 %700
        %v702 = vcvt.f32.s32 %v701
        %v703 = vcvt.f32.s32 %v697
        %v704 = vshll.u32 %v703, 16
        %v705 = vadd.s32 %v704, %v702
        %v706 = vsel %vm396, %v606, 2147483647
        %v707 = vand.u32 %v706, 65535
        %v708 = vshra.s32 %v706, 16
        %v709 = vcvt.s32.f32 %v707
        %v710 = vcvt.s32.f32 %v708
        %711 = vmin.xlane.f32.xlu0 %v710
        %v712 = vpop.xlane.xlu0 %711
        %vm713 = vcmp.eq.f32.partialorder %v710, %v712
        %v714 = vsel %vm713, %v709, inf
        %715 = vmin.xlane.f32.xlu0 %v714
        %v716 = vpop.xlane.xlu0 %715
        %v717 = vcvt.f32.s32 %v716
        %v718 = vcvt.f32.s32 %v712
        %v719 = vshll.u32 %v718, 16
        %v720 = vadd.s32 %v719, %v717
        %v721 = vsel %vm396, %v607, 2147483647
        %v722 = vand.u32 %v721, 65535
        %v723 = vshra.s32 %v721, 16
        %v724 = vcvt.s32.f32 %v722
        %v725 = vcvt.s32.f32 %v723
        %726 = vmin.xlane.f32.xlu0 %v725
        %v727 = vpop.xlane.xlu0 %726
        %vm728 = vcmp.eq.f32.partialorder %v725, %v727
        %v729 = vsel %vm728, %v724, inf
        %730 = vmin.xlane.f32.xlu0 %v729
        %v731 = vpop.xlane.xlu0 %730
        %v732 = vcvt.f32.s32 %v731
        %v733 = vcvt.f32.s32 %v727
        %v734 = vshll.u32 %v733, 16
        %v735 = vadd.s32 %v734, %v732
        %v736 = vsel %vm396, %v608, 2147483647
        %v737 = vand.u32 %v736, 65535
        %v738 = vshra.s32 %v736, 16
        %v739 = vcvt.s32.f32 %v737
        %v740 = vcvt.s32.f32 %v738
        %741 = vmin.xlane.f32.xlu0 %v740
        %v742 = vpop.xlane.xlu0 %741
        %vm743 = vcmp.eq.f32.partialorder %v740, %v742
        %v744 = vsel %vm743, %v739, inf
        %745 = vmin.xlane.f32.xlu0 %v744
        %v746 = vpop.xlane.xlu0 %745
        %v747 = vcvt.f32.s32 %v746
        %v748 = vcvt.f32.s32 %v742
        %v749 = vshll.u32 %v748, 16
        %v750 = vadd.s32 %v749, %v747
        %v751 = vsel %vm396, %v609, 2147483647
        %v752 = vand.u32 %v751, 65535
        %v753 = vshra.s32 %v751, 16
        %v754 = vcvt.s32.f32 %v752
        %v755 = vcvt.s32.f32 %v753
        %756 = vmin.xlane.f32.xlu0 %v755
        %v757 = vpop.xlane.xlu0 %756
        %vm758 = vcmp.eq.f32.partialorder %v755, %v757
        %v759 = vsel %vm758, %v754, inf
        %760 = vmin.xlane.f32.xlu0 %v759
        %v761 = vpop.xlane.xlu0 %760
        %v762 = vcvt.f32.s32 %v761
        %v763 = vcvt.f32.s32 %v757
        %v764 = vshll.u32 %v763, 16
        %v765 = vadd.s32 %v764, %v762
        %v766 = vsel %vm396, %v610, 2147483647
        %v767 = vand.u32 %v766, 65535
        %v768 = vshra.s32 %v766, 16
        %v769 = vcvt.s32.f32 %v767
        %v770 = vcvt.s32.f32 %v768
        %771 = vmin.xlane.f32.xlu0 %v770
        %v772 = vpop.xlane.xlu0 %771
        %vm773 = vcmp.eq.f32.partialorder %v770, %v772
        %v774 = vsel %vm773, %v769, inf
        %775 = vmin.xlane.f32.xlu0 %v774
        %v776 = vpop.xlane.xlu0 %775
        %v777 = vcvt.f32.s32 %v776
        %v778 = vcvt.f32.s32 %v772
        %v779 = vshll.u32 %v778, 16
        %v780 = vadd.s32 %v779, %v777
        %v781 = vsel %vm396, %v611, 2147483647
        %v782 = vand.u32 %v781, 65535
        %v783 = vshra.s32 %v781, 16
        %v784 = vcvt.s32.f32 %v782
        %v785 = vcvt.s32.f32 %v783
        %786 = vmin.xlane.f32.xlu0 %v785
        %v787 = vpop.xlane.xlu0 %786
        %vm788 = vcmp.eq.f32.partialorder %v785, %v787
        %v789 = vsel %vm788, %v784, inf
        %790 = vmin.xlane.f32.xlu0 %v789
        %v791 = vpop.xlane.xlu0 %790
        %v792 = vcvt.f32.s32 %v791
        %v793 = vcvt.f32.s32 %v787
        %v794 = vshll.u32 %v793, 16
        %v795 = vadd.s32 %v794, %v792
        %v796 = vsel %vm396, %v612, 2147483647
        %v797 = vand.u32 %v796, 65535
        %v798 = vshra.s32 %v796, 16
        %v799 = vcvt.s32.f32 %v797
        %v800 = vcvt.s32.f32 %v798
        %801 = vmin.xlane.f32.xlu0 %v800
        %v802 = vpop.xlane.xlu0 %801
        %vm803 = vcmp.eq.f32.partialorder %v800, %v802
        %v804 = vsel %vm803, %v799, inf
        %805 = vmin.xlane.f32.xlu0 %v804
        %v806 = vpop.xlane.xlu0 %805
        %v807 = vcvt.f32.s32 %v806
        %v808 = vcvt.f32.s32 %v802
        %v809 = vshll.u32 %v808, 16
        %v810 = vadd.s32 %v809, %v807
        %v811 = vsel %vm396, %v613, 2147483647
        %v812 = vand.u32 %v811, 65535
        %v813 = vshra.s32 %v811, 16
        %v814 = vcvt.s32.f32 %v812
        %v815 = vcvt.s32.f32 %v813
        %816 = vmin.xlane.f32.xlu0 %v815
        %v817 = vpop.xlane.xlu0 %816
        %vm818 = vcmp.eq.f32.partialorder %v815, %v817
        %v819 = vsel %vm818, %v814, inf
        %820 = vmin.xlane.f32.xlu0 %v819
        %v821 = vpop.xlane.xlu0 %820
        %v822 = vcvt.f32.s32 %v821
        %v823 = vcvt.f32.s32 %v817
        %v824 = vshll.u32 %v823, 16
        %v825 = vadd.s32 %v824, %v822
        %v826 = vsel %vm396, %v614, 2147483647
        %v827 = vand.u32 %v826, 65535
        %v828 = vshra.s32 %v826, 16
        %v829 = vcvt.s32.f32 %v827
        %v830 = vcvt.s32.f32 %v828
        %831 = vmin.xlane.f32.xlu0 %v830
        %v832 = vpop.xlane.xlu0 %831
        %vm833 = vcmp.eq.f32.partialorder %v830, %v832
        %v834 = vsel %vm833, %v829, inf
        %835 = vmin.xlane.f32.xlu0 %v834
        %v836 = vpop.xlane.xlu0 %835
        %v837 = vcvt.f32.s32 %v836
        %v838 = vcvt.f32.s32 %v832
        %v839 = vshll.u32 %v838, 16
        %v840 = vadd.s32 %v839, %v837
        %v841 = vsel %vm396, %v615, 2147483647
        %v842 = vand.u32 %v841, 65535
        %v843 = vshra.s32 %v841, 16
        %v844 = vcvt.s32.f32 %v842
        %v845 = vcvt.s32.f32 %v843
        %846 = vmin.xlane.f32.xlu0 %v845
        %v847 = vpop.xlane.xlu0 %846
        %vm848 = vcmp.eq.f32.partialorder %v845, %v847
        %v849 = vsel %vm848, %v844, inf
        %850 = vmin.xlane.f32.xlu0 %v849
        %v851 = vpop.xlane.xlu0 %850
        %v852 = vcvt.f32.s32 %v851
        %v853 = vcvt.f32.s32 %v847
        %v854 = vshll.u32 %v853, 16
        %v855 = vadd.s32 %v854, %v852
        %vm856 = vcmp.eq.s32.totalorder %v519, %v630
        %vm857 = vcmp.eq.s32.totalorder %v519, %v645
        %vm858 = vcmp.eq.s32.totalorder %v519, %v660
        %vm859 = vcmp.eq.s32.totalorder %v519, %v675
        %vm860 = vcmp.eq.s32.totalorder %v519, %v690
        %vm861 = vcmp.eq.s32.totalorder %v519, %v705
        %vm862 = vcmp.eq.s32.totalorder %v519, %v720
        %vm863 = vcmp.eq.s32.totalorder %v519, %v735
        %vm864 = vcmp.eq.s32.totalorder %v519, %v750
        %vm865 = vcmp.eq.s32.totalorder %v519, %v765
        %vm866 = vcmp.eq.s32.totalorder %v519, %v780
        %vm867 = vcmp.eq.s32.totalorder %v519, %v795
        %vm868 = vcmp.eq.s32.totalorder %v519, %v810
        %vm869 = vcmp.eq.s32.totalorder %v519, %v825
        %vm870 = vcmp.eq.s32.totalorder %v519, %v840
        %vm871 = vcmp.eq.s32.totalorder %v519, %v855
        %v872 = vsel %vm856, -inf, %v456
        %v873 = vsel %vm857, -inf, %v459
        %v874 = vsel %vm858, -inf, %v464
        %v875 = vsel %vm859, -inf, %v467
        %v876 = vsel %vm860, -inf, %v472
        %v877 = vsel %vm861, -inf, %v475
        %v878 = vsel %vm862, -inf, %v480
        %v879 = vsel %vm863, -inf, %v483
        %v880 = vsel %vm864, -inf, %v488
        %v881 = vsel %vm865, -inf, %v491
        %v882 = vsel %vm866, -inf, %v496
        %v883 = vsel %vm867, -inf, %v499
        %v884 = vsel %vm868, -inf, %v504
        %v885 = vsel %vm869, -inf, %v507
        %v886 = vsel %vm870, -inf, %v512
        %v887 = vsel %vm871, -inf, %v515
        %v888 = vsel %vm396, %v872, -inf
        %889 = vmax.xlane.f32.xlu0 %v888
        %v890 = vpop.xlane.xlu0 %889
        %v891 = vsel %vm396, %v873, -inf
        %892 = vmax.xlane.f32.xlu0 %v891
        %v893 = vpop.xlane.xlu0 %892
        %v894 = vsel %vm396, %v874, -inf
        %895 = vmax.xlane.f32.xlu0 %v894
        %v896 = vpop.xlane.xlu0 %895
        %v897 = vsel %vm396, %v875, -inf
        %898 = vmax.xlane.f32.xlu0 %v897
        %v899 = vpop.xlane.xlu0 %898
        %v900 = vsel %vm396, %v876, -inf
        %901 = vmax.xlane.f32.xlu0 %v900
        %v902 = vpop.xlane.xlu0 %901
        %v903 = vsel %vm396, %v877, -inf
        %904 = vmax.xlane.f32.xlu0 %v903
        %v905 = vpop.xlane.xlu0 %904
        %v906 = vsel %vm396, %v878, -inf
        %907 = vmax.xlane.f32.xlu0 %v906
        %v908 = vpop.xlane.xlu0 %907
        %v909 = vsel %vm396, %v879, -inf
        %910 = vmax.xlane.f32.xlu0 %v909
        %v911 = vpop.xlane.xlu0 %910
        %v912 = vsel %vm396, %v880, -inf
        %913 = vmax.xlane.f32.xlu0 %v912
        %v914 = vpop.xlane.xlu0 %913
        %v915 = vsel %vm396, %v881, -inf
        %916 = vmax.xlane.f32.xlu0 %v915
        %v917 = vpop.xlane.xlu0 %916
        %v918 = vsel %vm396, %v882, -inf
        %919 = vmax.xlane.f32.xlu0 %v918
        %v920 = vpop.xlane.xlu0 %919
        %v921 = vsel %vm396, %v883, -inf
        %922 = vmax.xlane.f32.xlu0 %v921
        %v923 = vpop.xlane.xlu0 %922
        %v924 = vsel %vm396, %v884, -inf
        %925 = vmax.xlane.f32.xlu0 %v924
        %v926 = vpop.xlane.xlu0 %925
        %v927 = vsel %vm396, %v885, -inf
        %928 = vmax.xlane.f32.xlu0 %v927
        %v929 = vpop.xlane.xlu0 %928
        %v930 = vsel %vm396, %v886, -inf
        %931 = vmax.xlane.f32.xlu0 %v930
        %v932 = vpop.xlane.xlu0 %931
        %v933 = vsel %vm396, %v887, -inf
        %934 = vmax.xlane.f32.xlu0 %v933
        %v935 = vpop.xlane.xlu0 %934
        %v936 = vadd.f32 %v568, %v890
        %v937 = vadd.f32 %v569, %v893
        %v938 = vadd.f32 %v570, %v896
        %v939 = vadd.f32 %v571, %v899
        %v940 = vadd.f32 %v572, %v902
        %v941 = vadd.f32 %v573, %v905
        %v942 = vadd.f32 %v574, %v908
        %v943 = vadd.f32 %v575, %v911
        %v944 = vadd.f32 %v576, %v914
        %v945 = vadd.f32 %v577, %v917
        %v946 = vadd.f32 %v578, %v920
        %v947 = vadd.f32 %v579, %v923
        %v948 = vadd.f32 %v580, %v926
        %v949 = vadd.f32 %v581, %v929
        %v950 = vadd.f32 %v582, %v932
        %v951 = vadd.f32 %v583, %v935
        %vm952 = vcmp.eq.f32.partialorder %v872, %v890
        %vm953 = vcmp.eq.f32.partialorder %v873, %v893
        %vm954 = vcmp.eq.f32.partialorder %v874, %v896
        %vm955 = vcmp.eq.f32.partialorder %v875, %v899
        %vm956 = vcmp.eq.f32.partialorder %v876, %v902
        %vm957 = vcmp.eq.f32.partialorder %v877, %v905
        %vm958 = vcmp.eq.f32.partialorder %v878, %v908
        %vm959 = vcmp.eq.f32.partialorder %v879, %v911
        %vm960 = vcmp.eq.f32.partialorder %v880, %v914
        %vm961 = vcmp.eq.f32.partialorder %v881, %v917
        %vm962 = vcmp.eq.f32.partialorder %v882, %v920
        %vm963 = vcmp.eq.f32.partialorder %v883, %v923
        %vm964 = vcmp.eq.f32.partialorder %v884, %v926
        %vm965 = vcmp.eq.f32.partialorder %v885, %v929
        %vm966 = vcmp.eq.f32.partialorder %v886, %v932
        %vm967 = vcmp.eq.f32.partialorder %v887, %v935
        %v968 = vsel %vm952, %v519, 32
        %v969 = vsel %vm953, %v519, 32
        %v970 = vsel %vm954, %v519, 32
        %v971 = vsel %vm955, %v519, 32
        %v972 = vsel %vm956, %v519, 32
        %v973 = vsel %vm957, %v519, 32
        %v974 = vsel %vm958, %v519, 32
        %v975 = vsel %vm959, %v519, 32
        %v976 = vsel %vm960, %v519, 32
        %v977 = vsel %vm961, %v519, 32
        %v978 = vsel %vm962, %v519, 32
        %v979 = vsel %vm963, %v519, 32
        %v980 = vsel %vm964, %v519, 32
        %v981 = vsel %vm965, %v519, 32
        %v982 = vsel %vm966, %v519, 32
        %v983 = vsel %vm967, %v519, 32
        %v984 = vsel %vm396, %v968, 2147483647
        %v985 = vand.u32 %v984, 65535
        %v986 = vshra.s32 %v984, 16
        %v987 = vcvt.s32.f32 %v985
        %v988 = vcvt.s32.f32 %v986
        %989 = vmin.xlane.f32.xlu0 %v988
        %v990 = vpop.xlane.xlu0 %989
        %vm991 = vcmp.eq.f32.partialorder %v988, %v990
        %v992 = vsel %vm991, %v987, inf
        %993 = vmin.xlane.f32.xlu0 %v992
        %v994 = vpop.xlane.xlu0 %993
        %v995 = vcvt.f32.s32 %v994
        %v996 = vcvt.f32.s32 %v990
        %v997 = vshll.u32 %v996, 16
        %v998 = vadd.s32 %v997, %v995
        %v999 = vsel %vm396, %v969, 2147483647
        %v1000 = vand.u32 %v999, 65535
        %v1001 = vshra.s32 %v999, 16
        %v1002 = vcvt.s32.f32 %v1000
        %v1003 = vcvt.s32.f32 %v1001
        %1004 = vmin.xlane.f32.xlu0 %v1003
        %v1005 = vpop.xlane.xlu0 %1004
        %vm1006 = vcmp.eq.f32.partialorder %v1003, %v1005
        %v1007 = vsel %vm1006, %v1002, inf
        %1008 = vmin.xlane.f32.xlu0 %v1007
        %v1009 = vpop.xlane.xlu0 %1008
        %v1010 = vcvt.f32.s32 %v1009
        %v1011 = vcvt.f32.s32 %v1005
        %v1012 = vshll.u32 %v1011, 16
        %v1013 = vadd.s32 %v1012, %v1010
        %v1014 = vsel %vm396, %v970, 2147483647
        %v1015 = vand.u32 %v1014, 65535
        %v1016 = vshra.s32 %v1014, 16
        %v1017 = vcvt.s32.f32 %v1015
        %v1018 = vcvt.s32.f32 %v1016
        %1019 = vmin.xlane.f32.xlu0 %v1018
        %v1020 = vpop.xlane.xlu0 %1019
        %vm1021 = vcmp.eq.f32.partialorder %v1018, %v1020
        %v1022 = vsel %vm1021, %v1017, inf
        %1023 = vmin.xlane.f32.xlu0 %v1022
        %v1024 = vpop.xlane.xlu0 %1023
        %v1025 = vcvt.f32.s32 %v1024
        %v1026 = vcvt.f32.s32 %v1020
        %v1027 = vshll.u32 %v1026, 16
        %v1028 = vadd.s32 %v1027, %v1025
        %v1029 = vsel %vm396, %v971, 2147483647
        %v1030 = vand.u32 %v1029, 65535
        %v1031 = vshra.s32 %v1029, 16
        %v1032 = vcvt.s32.f32 %v1030
        %v1033 = vcvt.s32.f32 %v1031
        %1034 = vmin.xlane.f32.xlu0 %v1033
        %v1035 = vpop.xlane.xlu0 %1034
        %vm1036 = vcmp.eq.f32.partialorder %v1033, %v1035
        %v1037 = vsel %vm1036, %v1032, inf
        %1038 = vmin.xlane.f32.xlu0 %v1037
        %v1039 = vpop.xlane.xlu0 %1038
        %v1040 = vcvt.f32.s32 %v1039
        %v1041 = vcvt.f32.s32 %v1035
        %v1042 = vshll.u32 %v1041, 16
        %v1043 = vadd.s32 %v1042, %v1040
        %v1044 = vsel %vm396, %v972, 2147483647
        %v1045 = vand.u32 %v1044, 65535
        %v1046 = vshra.s32 %v1044, 16
        %v1047 = vcvt.s32.f32 %v1045
        %v1048 = vcvt.s32.f32 %v1046
        %1049 = vmin.xlane.f32.xlu0 %v1048
        %v1050 = vpop.xlane.xlu0 %1049
        %vm1051 = vcmp.eq.f32.partialorder %v1048, %v1050
        %v1052 = vsel %vm1051, %v1047, inf
        %1053 = vmin.xlane.f32.xlu0 %v1052
        %v1054 = vpop.xlane.xlu0 %1053
        %v1055 = vcvt.f32.s32 %v1054
        %v1056 = vcvt.f32.s32 %v1050
        %v1057 = vshll.u32 %v1056, 16
        %v1058 = vadd.s32 %v1057, %v1055
        %v1059 = vsel %vm396, %v973, 2147483647
        %v1060 = vand.u32 %v1059, 65535
        %v1061 = vshra.s32 %v1059, 16
        %v1062 = vcvt.s32.f32 %v1060
        %v1063 = vcvt.s32.f32 %v1061
        %1064 = vmin.xlane.f32.xlu0 %v1063
        %v1065 = vpop.xlane.xlu0 %1064
        %vm1066 = vcmp.eq.f32.partialorder %v1063, %v1065
        %v1067 = vsel %vm1066, %v1062, inf
        %1068 = vmin.xlane.f32.xlu0 %v1067
        %v1069 = vpop.xlane.xlu0 %1068
        %v1070 = vcvt.f32.s32 %v1069
        %v1071 = vcvt.f32.s32 %v1065
        %v1072 = vshll.u32 %v1071, 16
        %v1073 = vadd.s32 %v1072, %v1070
        %v1074 = vsel %vm396, %v974, 2147483647
        %v1075 = vand.u32 %v1074, 65535
        %v1076 = vshra.s32 %v1074, 16
        %v1077 = vcvt.s32.f32 %v1075
        %v1078 = vcvt.s32.f32 %v1076
        %1079 = vmin.xlane.f32.xlu0 %v1078
        %v1080 = vpop.xlane.xlu0 %1079
        %vm1081 = vcmp.eq.f32.partialorder %v1078, %v1080
        %v1082 = vsel %vm1081, %v1077, inf
        %1083 = vmin.xlane.f32.xlu0 %v1082
        %v1084 = vpop.xlane.xlu0 %1083
        %v1085 = vcvt.f32.s32 %v1084
        %v1086 = vcvt.f32.s32 %v1080
        %v1087 = vshll.u32 %v1086, 16
        %v1088 = vadd.s32 %v1087, %v1085
        %v1089 = vsel %vm396, %v975, 2147483647
        %v1090 = vand.u32 %v1089, 65535
        %v1091 = vshra.s32 %v1089, 16
        %v1092 = vcvt.s32.f32 %v1090
        %v1093 = vcvt.s32.f32 %v1091
        %1094 = vmin.xlane.f32.xlu0 %v1093
        %v1095 = vpop.xlane.xlu0 %1094
        %vm1096 = vcmp.eq.f32.partialorder %v1093, %v1095
        %v1097 = vsel %vm1096, %v1092, inf
        %1098 = vmin.xlane.f32.xlu0 %v1097
        %v1099 = vpop.xlane.xlu0 %1098
        %v1100 = vcvt.f32.s32 %v1099
        %v1101 = vcvt.f32.s32 %v1095
        %v1102 = vshll.u32 %v1101, 16
        %v1103 = vadd.s32 %v1102, %v1100
        %v1104 = vsel %vm396, %v976, 2147483647
        %v1105 = vand.u32 %v1104, 65535
        %v1106 = vshra.s32 %v1104, 16
        %v1107 = vcvt.s32.f32 %v1105
        %v1108 = vcvt.s32.f32 %v1106
        %1109 = vmin.xlane.f32.xlu0 %v1108
        %v1110 = vpop.xlane.xlu0 %1109
        %vm1111 = vcmp.eq.f32.partialorder %v1108, %v1110
        %v1112 = vsel %vm1111, %v1107, inf
        %1113 = vmin.xlane.f32.xlu0 %v1112
        %v1114 = vpop.xlane.xlu0 %1113
        %v1115 = vcvt.f32.s32 %v1114
        %v1116 = vcvt.f32.s32 %v1110
        %v1117 = vshll.u32 %v1116, 16
        %v1118 = vadd.s32 %v1117, %v1115
        %v1119 = vsel %vm396, %v977, 2147483647
        %v1120 = vand.u32 %v1119, 65535
        %v1121 = vshra.s32 %v1119, 16
        %v1122 = vcvt.s32.f32 %v1120
        %v1123 = vcvt.s32.f32 %v1121
        %1124 = vmin.xlane.f32.xlu0 %v1123
        %v1125 = vpop.xlane.xlu0 %1124
        %vm1126 = vcmp.eq.f32.partialorder %v1123, %v1125
        %v1127 = vsel %vm1126, %v1122, inf
        %1128 = vmin.xlane.f32.xlu0 %v1127
        %v1129 = vpop.xlane.xlu0 %1128
        %v1130 = vcvt.f32.s32 %v1129
        %v1131 = vcvt.f32.s32 %v1125
        %v1132 = vshll.u32 %v1131, 16
        %v1133 = vadd.s32 %v1132, %v1130
        %v1134 = vsel %vm396, %v978, 2147483647
        %v1135 = vand.u32 %v1134, 65535
        %v1136 = vshra.s32 %v1134, 16
        %v1137 = vcvt.s32.f32 %v1135
        %v1138 = vcvt.s32.f32 %v1136
        %1139 = vmin.xlane.f32.xlu0 %v1138
        %v1140 = vpop.xlane.xlu0 %1139
        %vm1141 = vcmp.eq.f32.partialorder %v1138, %v1140
        %v1142 = vsel %vm1141, %v1137, inf
        %1143 = vmin.xlane.f32.xlu0 %v1142
        %v1144 = vpop.xlane.xlu0 %1143
        %v1145 = vcvt.f32.s32 %v1144
        %v1146 = vcvt.f32.s32 %v1140
        %v1147 = vshll.u32 %v1146, 16
        %v1148 = vadd.s32 %v1147, %v1145
        %v1149 = vsel %vm396, %v979, 2147483647
        %v1150 = vand.u32 %v1149, 65535
        %v1151 = vshra.s32 %v1149, 16
        %v1152 = vcvt.s32.f32 %v1150
        %v1153 = vcvt.s32.f32 %v1151
        %1154 = vmin.xlane.f32.xlu0 %v1153
        %v1155 = vpop.xlane.xlu0 %1154
        %vm1156 = vcmp.eq.f32.partialorder %v1153, %v1155
        %v1157 = vsel %vm1156, %v1152, inf
        %1158 = vmin.xlane.f32.xlu0 %v1157
        %v1159 = vpop.xlane.xlu0 %1158
        %v1160 = vcvt.f32.s32 %v1159
        %v1161 = vcvt.f32.s32 %v1155
        %v1162 = vshll.u32 %v1161, 16
        %v1163 = vadd.s32 %v1162, %v1160
        %v1164 = vsel %vm396, %v980, 2147483647
        %v1165 = vand.u32 %v1164, 65535
        %v1166 = vshra.s32 %v1164, 16
        %v1167 = vcvt.s32.f32 %v1165
        %v1168 = vcvt.s32.f32 %v1166
        %1169 = vmin.xlane.f32.xlu0 %v1168
        %v1170 = vpop.xlane.xlu0 %1169
        %vm1171 = vcmp.eq.f32.partialorder %v1168, %v1170
        %v1172 = vsel %vm1171, %v1167, inf
        %1173 = vmin.xlane.f32.xlu0 %v1172
        %v1174 = vpop.xlane.xlu0 %1173
        %v1175 = vcvt.f32.s32 %v1174
        %v1176 = vcvt.f32.s32 %v1170
        %v1177 = vshll.u32 %v1176, 16
        %v1178 = vadd.s32 %v1177, %v1175
        %v1179 = vsel %vm396, %v981, 2147483647
        %v1180 = vand.u32 %v1179, 65535
        %v1181 = vshra.s32 %v1179, 16
        %v1182 = vcvt.s32.f32 %v1180
        %v1183 = vcvt.s32.f32 %v1181
        %1184 = vmin.xlane.f32.xlu0 %v1183
        %v1185 = vpop.xlane.xlu0 %1184
        %vm1186 = vcmp.eq.f32.partialorder %v1183, %v1185
        %v1187 = vsel %vm1186, %v1182, inf
        %1188 = vmin.xlane.f32.xlu0 %v1187
        %v1189 = vpop.xlane.xlu0 %1188
        %v1190 = vcvt.f32.s32 %v1189
        %v1191 = vcvt.f32.s32 %v1185
        %v1192 = vshll.u32 %v1191, 16
        %v1193 = vadd.s32 %v1192, %v1190
        %v1194 = vsel %vm396, %v982, 2147483647
        %v1195 = vand.u32 %v1194, 65535
        %v1196 = vshra.s32 %v1194, 16
        %v1197 = vcvt.s32.f32 %v1195
        %v1198 = vcvt.s32.f32 %v1196
        %1199 = vmin.xlane.f32.xlu0 %v1198
        %v1200 = vpop.xlane.xlu0 %1199
        %vm1201 = vcmp.eq.f32.partialorder %v1198, %v1200
        %v1202 = vsel %vm1201, %v1197, inf
        %1203 = vmin.xlane.f32.xlu0 %v1202
        %v1204 = vpop.xlane.xlu0 %1203
        %v1205 = vcvt.f32.s32 %v1204
        %v1206 = vcvt.f32.s32 %v1200
        %v1207 = vshll.u32 %v1206, 16
        %v1208 = vadd.s32 %v1207, %v1205
        %v1209 = vsel %vm396, %v983, 2147483647
        %v1210 = vand.u32 %v1209, 65535
        %v1211 = vshra.s32 %v1209, 16
        %v1212 = vcvt.s32.f32 %v1210
        %v1213 = vcvt.s32.f32 %v1211
        %1214 = vmin.xlane.f32.xlu0 %v1213
        %v1215 = vpop.xlane.xlu0 %1214
        %vm1216 = vcmp.eq.f32.partialorder %v1213, %v1215
        %v1217 = vsel %vm1216, %v1212, inf
        %1218 = vmin.xlane.f32.xlu0 %v1217
        %v1219 = vpop.xlane.xlu0 %1218
        %v1220 = vcvt.f32.s32 %v1219
        %v1221 = vcvt.f32.s32 %v1215
        %v1222 = vshll.u32 %v1221, 16
        %v1223 = vadd.s32 %v1222, %v1220
        %vm1224 = vcmp.eq.s32.totalorder %v519, %v998
        %vm1225 = vcmp.eq.s32.totalorder %v519, %v1013
        %vm1226 = vcmp.eq.s32.totalorder %v519, %v1028
        %vm1227 = vcmp.eq.s32.totalorder %v519, %v1043
        %vm1228 = vcmp.eq.s32.totalorder %v519, %v1058
        %vm1229 = vcmp.eq.s32.totalorder %v519, %v1073
        %vm1230 = vcmp.eq.s32.totalorder %v519, %v1088
        %vm1231 = vcmp.eq.s32.totalorder %v519, %v1103
        %vm1232 = vcmp.eq.s32.totalorder %v519, %v1118
        %vm1233 = vcmp.eq.s32.totalorder %v519, %v1133
        %vm1234 = vcmp.eq.s32.totalorder %v519, %v1148
        %vm1235 = vcmp.eq.s32.totalorder %v519, %v1163
        %vm1236 = vcmp.eq.s32.totalorder %v519, %v1178
        %vm1237 = vcmp.eq.s32.totalorder %v519, %v1193
        %vm1238 = vcmp.eq.s32.totalorder %v519, %v1208
        %vm1239 = vcmp.eq.s32.totalorder %v519, %v1223
        %v1240 = vsel %vm1224, -inf, %v872
        %v1241 = vsel %vm1225, -inf, %v873
        %v1242 = vsel %vm1226, -inf, %v874
        %v1243 = vsel %vm1227, -inf, %v875
        %v1244 = vsel %vm1228, -inf, %v876
        %v1245 = vsel %vm1229, -inf, %v877
        %v1246 = vsel %vm1230, -inf, %v878
        %v1247 = vsel %vm1231, -inf, %v879
        %v1248 = vsel %vm1232, -inf, %v880
        %v1249 = vsel %vm1233, -inf, %v881
        %v1250 = vsel %vm1234, -inf, %v882
        %v1251 = vsel %vm1235, -inf, %v883
        %v1252 = vsel %vm1236, -inf, %v884
        %v1253 = vsel %vm1237, -inf, %v885
        %v1254 = vsel %vm1238, -inf, %v886
        %v1255 = vsel %vm1239, -inf, %v887
        %v1256 = vsel %vm396, %v1240, -inf
        %1257 = vmax.xlane.f32.xlu0 %v1256
        %v1258 = vpop.xlane.xlu0 %1257
        %v1259 = vsel %vm396, %v1241, -inf
        %1260 = vmax.xlane.f32.xlu0 %v1259
        %v1261 = vpop.xlane.xlu0 %1260
        %v1262 = vsel %vm396, %v1242, -inf
        %1263 = vmax.xlane.f32.xlu0 %v1262
        %v1264 = vpop.xlane.xlu0 %1263
        %v1265 = vsel %vm396, %v1243, -inf
        %1266 = vmax.xlane.f32.xlu0 %v1265
        %v1267 = vpop.xlane.xlu0 %1266
        %v1268 = vsel %vm396, %v1244, -inf
        %1269 = vmax.xlane.f32.xlu0 %v1268
        %v1270 = vpop.xlane.xlu0 %1269
        %v1271 = vsel %vm396, %v1245, -inf
        %1272 = vmax.xlane.f32.xlu0 %v1271
        %v1273 = vpop.xlane.xlu0 %1272
        %v1274 = vsel %vm396, %v1246, -inf
        %1275 = vmax.xlane.f32.xlu0 %v1274
        %v1276 = vpop.xlane.xlu0 %1275
        %v1277 = vsel %vm396, %v1247, -inf
        %1278 = vmax.xlane.f32.xlu0 %v1277
        %v1279 = vpop.xlane.xlu0 %1278
        %v1280 = vsel %vm396, %v1248, -inf
        %1281 = vmax.xlane.f32.xlu0 %v1280
        %v1282 = vpop.xlane.xlu0 %1281
        %v1283 = vsel %vm396, %v1249, -inf
        %1284 = vmax.xlane.f32.xlu0 %v1283
        %v1285 = vpop.xlane.xlu0 %1284
        %v1286 = vsel %vm396, %v1250, -inf
        %1287 = vmax.xlane.f32.xlu0 %v1286
        %v1288 = vpop.xlane.xlu0 %1287
        %v1289 = vsel %vm396, %v1251, -inf
        %1290 = vmax.xlane.f32.xlu0 %v1289
        %v1291 = vpop.xlane.xlu0 %1290
        %v1292 = vsel %vm396, %v1252, -inf
        %1293 = vmax.xlane.f32.xlu0 %v1292
        %v1294 = vpop.xlane.xlu0 %1293
        %v1295 = vsel %vm396, %v1253, -inf
        %1296 = vmax.xlane.f32.xlu0 %v1295
        %v1297 = vpop.xlane.xlu0 %1296
        %v1298 = vsel %vm396, %v1254, -inf
        %1299 = vmax.xlane.f32.xlu0 %v1298
        %v1300 = vpop.xlane.xlu0 %1299
        %v1301 = vsel %vm396, %v1255, -inf
        %1302 = vmax.xlane.f32.xlu0 %v1301
        %v1303 = vpop.xlane.xlu0 %1302
        %v1304 = vadd.f32 %v936, %v1258
        %v1305 = vadd.f32 %v937, %v1261
        %v1306 = vadd.f32 %v938, %v1264
        %v1307 = vadd.f32 %v939, %v1267
        %v1308 = vadd.f32 %v940, %v1270
        %v1309 = vadd.f32 %v941, %v1273
        %v1310 = vadd.f32 %v942, %v1276
        %v1311 = vadd.f32 %v943, %v1279
        %v1312 = vadd.f32 %v944, %v1282
        %v1313 = vadd.f32 %v945, %v1285
        %v1314 = vadd.f32 %v946, %v1288
        %v1315 = vadd.f32 %v947, %v1291
        %v1316 = vadd.f32 %v948, %v1294
        %v1317 = vadd.f32 %v949, %v1297
        %v1318 = vadd.f32 %v950, %v1300
        %v1319 = vadd.f32 %v951, %v1303
        %v1320 = vstv %s25
        %vm1321 = vcmp.eq.s32.totalorder %v519, %v1320
        %v1322 = vld [vmem:[#allocation2] sm:$0xff]
        %v1323 = vld [vmem:[#allocation2 + $0x8] sm:$0xff]
        %v1324 = vld [vmem:[#allocation2 + $0x10] sm:$0xff]
        %v1325 = vld [vmem:[#allocation2 + $0x18] sm:$0xff]
        %v1326 = vld [vmem:[#allocation2 + $0x20] sm:$0xff]
        %v1327 = vld [vmem:[#allocation2 + $0x28] sm:$0xff]
        %v1328 = vld [vmem:[#allocation2 + $0x30] sm:$0xff]
        %v1329 = vld [vmem:[#allocation2 + $0x38] sm:$0xff]
        %v1330 = vld [vmem:[#allocation2 + $0x40] sm:$0xff]
        %v1331 = vld [vmem:[#allocation2 + $0x48] sm:$0xff]
        %v1332 = vld [vmem:[#allocation2 + $0x50] sm:$0xff]
        %v1333 = vld [vmem:[#allocation2 + $0x58] sm:$0xff]
        %v1334 = vld [vmem:[#allocation2 + $0x60] sm:$0xff]
        %v1335 = vld [vmem:[#allocation2 + $0x68] sm:$0xff]
        %v1336 = vld [vmem:[#allocation2 + $0x70] sm:$0xff]
        %v1337 = vld [vmem:[#allocation2 + $0x78] sm:$0xff]
        %v1338 = vsel %vm1321, %v1304, %v1322
        %v1339 = vsel %vm1321, %v1305, %v1323
        %v1340 = vsel %vm1321, %v1306, %v1324
        %v1341 = vsel %vm1321, %v1307, %v1325
        %v1342 = vsel %vm1321, %v1308, %v1326
        %v1343 = vsel %vm1321, %v1309, %v1327
        %v1344 = vsel %vm1321, %v1310, %v1328
        %v1345 = vsel %vm1321, %v1311, %v1329
        %v1346 = vsel %vm1321, %v1312, %v1330
        %v1347 = vsel %vm1321, %v1313, %v1331
        %v1348 = vsel %vm1321, %v1314, %v1332
        %v1349 = vsel %vm1321, %v1315, %v1333
        %v1350 = vsel %vm1321, %v1316, %v1334
        %v1351 = vsel %vm1321, %v1317, %v1335
        %v1352 = vsel %vm1321, %v1318, %v1336
        %v1353 = vsel %vm1321, %v1319, %v1337
        %1354 = vst [vmem:[#allocation2] sm:$0xff] %v1338
        %1355 = vst [vmem:[#allocation2 + $0x8] sm:$0xff] %v1339
        %1356 = vst [vmem:[#allocation2 + $0x10] sm:$0xff] %v1340
        %1357 = vst [vmem:[#allocation2 + $0x18] sm:$0xff] %v1341
        %1358 = vst [vmem:[#allocation2 + $0x20] sm:$0xff] %v1342
        %1359 = vst [vmem:[#allocation2 + $0x28] sm:$0xff] %v1343
        %1360 = vst [vmem:[#allocation2 + $0x30] sm:$0xff] %v1344
        %1361 = vst [vmem:[#allocation2 + $0x38] sm:$0xff] %v1345
        %1362 = vst [vmem:[#allocation2 + $0x40] sm:$0xff] %v1346
        %1363 = vst [vmem:[#allocation2 + $0x48] sm:$0xff] %v1347
        %1364 = vst [vmem:[#allocation2 + $0x50] sm:$0xff] %v1348
        %1365 = vst [vmem:[#allocation2 + $0x58] sm:$0xff] %v1349
        %1366 = vst [vmem:[#allocation2 + $0x60] sm:$0xff] %v1350
        %1367 = vst [vmem:[#allocation2 + $0x68] sm:$0xff] %v1351
        %1368 = vst [vmem:[#allocation2 + $0x70] sm:$0xff] %v1352
        %1369 = vst [vmem:[#allocation2 + $0x78] sm:$0xff] %v1353
        %p1370 = scmp.eq.s32.totalorder %s25, 1
        // Predicated region
        $region41: #{tpu_custom_call.1} parent=35 // pred_check
          %p1371 = pneg %p1370
        $region42: #{tpu_custom_call.1} parent=35 // pred_check_branch
          %1373 = sbr.rel (%p1371) target = $region44
        $region43: #{tpu_custom_call.1} parent=35 // pred_region
          %v1374 = vld [vmem:[#allocation2] sm:$0xff]
          %v1375 = vld [vmem:[#allocation2 + $0x8] sm:$0xff]
          %v1376 = vld [vmem:[#allocation2 + $0x10] sm:$0xff]
          %v1377 = vld [vmem:[#allocation2 + $0x18] sm:$0xff]
          %v1378 = vld [vmem:[#allocation2 + $0x20] sm:$0xff]
          %v1379 = vld [vmem:[#allocation2 + $0x28] sm:$0xff]
          %v1380 = vld [vmem:[#allocation2 + $0x30] sm:$0xff]
          %v1381 = vld [vmem:[#allocation2 + $0x38] sm:$0xff]
          %v1382 = vld [vmem:[#allocation2 + $0x40] sm:$0xff]
          %v1383 = vld [vmem:[#allocation2 + $0x48] sm:$0xff]
          %v1384 = vld [vmem:[#allocation2 + $0x50] sm:$0xff]
          %v1385 = vld [vmem:[#allocation2 + $0x58] sm:$0xff]
          %v1386 = vld [vmem:[#allocation2 + $0x60] sm:$0xff]
          %v1387 = vld [vmem:[#allocation2 + $0x68] sm:$0xff]
          %v1388 = vld [vmem:[#allocation2 + $0x70] sm:$0xff]
          %v1389 = vld [vmem:[#allocation2 + $0x78] sm:$0xff]
          %v1390 = vld [vmem:[%s282] sm:$0xff]
          %v1391 = vld [vmem:[%s282 + $0x8] sm:$0xff]
          %v1392 = vld [vmem:[%s282 + $0x10] sm:$0xff]
          %v1393 = vld [vmem:[%s282 + $0x18] sm:$0xff]
          %v1394 = vld [vmem:[%s282 + $0x20] sm:$0xff]
          %v1395 = vld [vmem:[%s282 + $0x28] sm:$0xff]
          %v1396 = vld [vmem:[%s282 + $0x30] sm:$0xff]
          %v1397 = vld [vmem:[%s282 + $0x38] sm:$0xff]
          %v1398 = vld [vmem:[%s282 + $0x40] sm:$0xff]
          %v1399 = vld [vmem:[%s282 + $0x48] sm:$0xff]
          %v1400 = vld [vmem:[%s282 + $0x50] sm:$0xff]
          %v1401 = vld [vmem:[%s282 + $0x58] sm:$0xff]
          %v1402 = vld [vmem:[%s282 + $0x60] sm:$0xff]
          %v1403 = vld [vmem:[%s282 + $0x68] sm:$0xff]
          %v1404 = vld [vmem:[%s282 + $0x70] sm:$0xff]
          %v1405 = vld [vmem:[%s282 + $0x78] sm:$0xff]
          %1407 = vset.pattern.permute.xlu0 0
          %1408 = vperm.xlu0 %1407, %v1390
          %v1409 = vpop.permute.xlu0 %1408
          %1412 = vset.pattern.permute.xlu0 0
          %1413 = vperm.xlu0 %1412, %v1391
          %v1414 = vpop.permute.xlu0 %1413
          %1417 = vset.pattern.permute.xlu0 0
          %1418 = vperm.xlu0 %1417, %v1392
          %v1419 = vpop.permute.xlu0 %1418
          %1422 = vset.pattern.permute.xlu0 0
          %1423 = vperm.xlu0 %1422, %v1393
          %v1424 = vpop.permute.xlu0 %1423
          %1427 = vset.pattern.permute.xlu0 0
          %1428 = vperm.xlu0 %1427, %v1394
          %v1429 = vpop.permute.xlu0 %1428
          %1432 = vset.pattern.permute.xlu0 0
          %1433 = vperm.xlu0 %1432, %v1395
          %v1434 = vpop.permute.xlu0 %1433
          %1437 = vset.pattern.permute.xlu0 0
          %1438 = vperm.xlu0 %1437, %v1396
          %v1439 = vpop.permute.xlu0 %1438
          %1442 = vset.pattern.permute.xlu0 0
          %1443 = vperm.xlu0 %1442, %v1397
          %v1444 = vpop.permute.xlu0 %1443
          %1447 = vset.pattern.permute.xlu0 0
          %1448 = vperm.xlu0 %1447, %v1398
          %v1449 = vpop.permute.xlu0 %1448
          %1452 = vset.pattern.permute.xlu0 0
          %1453 = vperm.xlu0 %1452, %v1399
          %v1454 = vpop.permute.xlu0 %1453
          %1457 = vset.pattern.permute.xlu0 0
          %1458 = vperm.xlu0 %1457, %v1400
          %v1459 = vpop.permute.xlu0 %1458
          %1462 = vset.pattern.permute.xlu0 0
          %1463 = vperm.xlu0 %1462, %v1401
          %v1464 = vpop.permute.xlu0 %1463
          %1467 = vset.pattern.permute.xlu0 0
          %1468 = vperm.xlu0 %1467, %v1402
          %v1469 = vpop.permute.xlu0 %1468
          %1472 = vset.pattern.permute.xlu0 0
          %1473 = vperm.xlu0 %1472, %v1403
          %v1474 = vpop.permute.xlu0 %1473
          %1477 = vset.pattern.permute.xlu0 0
          %1478 = vperm.xlu0 %1477, %v1404
          %v1479 = vpop.permute.xlu0 %1478
          %1482 = vset.pattern.permute.xlu0 0
          %1483 = vperm.xlu0 %1482, %v1405
          %v1484 = vpop.permute.xlu0 %1483
          %v1486 = vmul.f32 %v1374, %v1409
          %v1487 = vmul.f32 %v1375, %v1414
          %v1488 = vmul.f32 %v1376, %v1419
          %v1489 = vmul.f32 %v1377, %v1424
          %v1490 = vmul.f32 %v1378, %v1429
          %v1491 = vmul.f32 %v1379, %v1434
          %v1492 = vmul.f32 %v1380, %v1439
          %v1493 = vmul.f32 %v1381, %v1444
          %v1494 = vmul.f32 %v1382, %v1449
          %v1495 = vmul.f32 %v1383, %v1454
          %v1496 = vmul.f32 %v1384, %v1459
          %v1497 = vmul.f32 %v1385, %v1464
          %v1498 = vmul.f32 %v1386, %v1469
          %v1499 = vmul.f32 %v1387, %v1474
          %v1500 = vmul.f32 %v1388, %v1479
          %v1501 = vmul.f32 %v1389, %v1484
          %v1502 = vld [vmem:[%s0] sm:$0xff]
          %1503 = vmatprep.subr.mxu0 0.0
          %1504 = vmatpush1.msra.mxu0 %v1486
          %1505 = vmatprep.subr.mxu0 0.0
          %1506 = vmatpush1.msra.mxu0 %v1487
          %1507 = vmatprep.subr.mxu0 0.0
          %1508 = vmatpush1.msra.mxu0 %v1488
          %1509 = vmatprep.subr.mxu0 0.0
          %1510 = vmatpush1.msra.mxu0 %v1489
          %1511 = vmatprep.subr.mxu0 0.0
          %1512 = vmatpush1.msra.mxu0 %v1490
          %1513 = vmatprep.subr.mxu0 0.0
          %1514 = vmatpush1.msra.mxu0 %v1491
          %1515 = vmatprep.subr.mxu0 0.0
          %1516 = vmatpush1.msra.mxu0 %v1492
          %1517 = vmatprep.subr.mxu0 0.0
          %1518 = vmatpush1.msra.mxu0 %v1493
          %1519 = vmatprep.subr.mxu0 0.0
          %1520 = vmatpush1.msra.mxu0 %v1494
          %1521 = vmatprep.subr.mxu0 0.0
          %1522 = vmatpush1.msra.mxu0 %v1495
          %1523 = vmatprep.subr.mxu0 0.0
          %1524 = vmatpush1.msra.mxu0 %v1496
          %1525 = vmatprep.subr.mxu0 0.0
          %1526 = vmatpush1.msra.mxu0 %v1497
          %1527 = vmatprep.subr.mxu0 0.0
          %1528 = vmatpush1.msra.mxu0 %v1498
          %1529 = vmatprep.subr.mxu0 0.0
          %1530 = vmatpush1.msra.mxu0 %v1499
          %1531 = vmatprep.subr.mxu0 0.0
          %1532 = vmatpush1.msra.mxu0 %v1500
          %1533 = vmatprep.subr.mxu0 0.0
          %1534 = vmatpush1.msra.mxu0 %v1501
          %1535 = vmatprep.subr.mxu0 0.0
          %1536 = vmatpush1.msra.mxu0 0.0
          %1537 = vmatprep.subr.mxu0 0.0
          %1538 = vmatpush1.msra.mxu0 0.0
          %1539 = vmatprep.subr.mxu0 0.0
          %1540 = vmatpush1.msra.mxu0 0.0
          %1541 = vmatprep.subr.mxu0 0.0
          %1542 = vmatpush1.msra.mxu0 0.0
          %1543 = vmatprep.subr.mxu0 0.0
          %1544 = vmatpush1.msra.mxu0 0.0
          %1545 = vmatprep.subr.mxu0 0.0
          %1546 = vmatpush1.msra.mxu0 0.0
          %1547 = vmatprep.subr.mxu0 0.0
          %1548 = vmatpush1.msra.mxu0 0.0
          %1549 = vmatprep.subr.mxu0 0.0
          %1550 = vmatpush1.msra.mxu0 0.0
          %1551 = vmatprep.subr.mxu0 0.0
          %1552 = vmatpush1.msra.mxu0 0.0
          %1553 = vmatprep.subr.mxu0 0.0
          %1554 = vmatpush1.msra.mxu0 0.0
          %1555 = vmatprep.subr.mxu0 0.0
          %1556 = vmatpush1.msra.mxu0 0.0
          %1557 = vmatprep.subr.mxu0 0.0
          %1558 = vmatpush1.msra.mxu0 0.0
          %1559 = vmatprep.subr.mxu0 0.0
          %1560 = vmatpush1.msra.mxu0 0.0
          %1561 = vmatprep.subr.mxu0 0.0
          %1562 = vmatpush1.msra.mxu0 0.0
          %1563 = vmatprep.subr.mxu0 0.0
          %1564 = vmatpush1.msra.mxu0 0.0
          %1565 = vmatprep.subr.mxu0 0.0
          %1566 = vmatpush1.msra.mxu0 0.0
          %1567 = vmatprep.mubr.f32.mxu0 0.0
          %1568 = vmatmul.mubr.f32.gmra.mrb[0].mxu0 %v1502
          %v1569 = vpop.f32.mrb[0].mxu0
          %v1570 = vadd.f32 0.0, %v1569
          %v1571 = vpop.f32.mrb[0].mxu0
          %1572 = vdwg.mxu0
          %1573 = vst [vmem:[%s273] sm:$0xff] %v1570
        $region44: #{tpu_custom_call.1} parent=35 // pred_fallthru
          _
        %s1574 = sand.u32 %s152, 1
        %s1575 = scalar_lea.sflag [#allocation4], %s1574
        %s1576 = sand.u32 %s152, 1
        %s1577 = smul.addr %s1576, 8
        %s1578 = scalar_lea.vmem [#allocation3], %s1577
        // Predicated region
        $region45: #{tpu_custom_call.1} parent=35 // pred_check
          %p1579 = pneg %p162
        $region46: #{tpu_custom_call.1} parent=35 // pred_check_branch
          %1581 = sbr.rel (%p1579) target = $region48
        $region47: #{tpu_custom_call.1} parent=35 // pred_region
          %s1583 = ssub.s32 128, 128
          %1584 = vsyncadd %s1575, %s1583
          %s1585 = smul.addr %s23, 2
          %s1586 = sadd.s32 %s24, %s1585
          %s1587 = smul.addr %s1586, 128
          %s1588 = scalar_lea.hbm %s4, %s1587
          %s1590 = sshll.u32 %s1578, 4
          %s1591 = int_to_ptr.vmem [resolvable:$true] %s1590
          %1593 = dma.vmem_to_hbm [thread:$0]  %s1591, 128, %s1588, %s1575
        $region48: #{tpu_custom_call.1} parent=35 // pred_fallthru
          _
      $region36: #{tpu_custom_call.1} parent=5 // pred_fallthru
        _
      %p1594 = scmp.le.s32.totalorder 2, %s13
      // Predicated region
      $region49: #{tpu_custom_call.1} parent=5 // pred_check
        %p1595 = pneg %p1594
      $region50: #{tpu_custom_call.1} parent=5 // pred_check_branch
        %1597 = sbr.rel (%p1595) target = $region52
      $region51: #{tpu_custom_call.1} parent=5 // pred_region
        %s1598 = ssub.s32 %s13, 2
        // Predicated region
        $region53: #{tpu_custom_call.1} parent=51 // pred_check
          %p1599 = pneg %p168
        $region54: #{tpu_custom_call.1} parent=51 // pred_check_branch
          %1601 = sbr.rel (%p1599) target = $region56
        $region55: #{tpu_custom_call.1} parent=51 // pred_region
          %s1602 = sand.u32 %s153, 1
          %s1603 = scalar_lea.sflag [#allocation4], %s1602
          %s1604 = sand.u32 %s153, 1
          %s1605 = smul.addr %s1604, 8
          %s1606 = scalar_lea.vmem [#allocation3], %s1605
          %1607 = dma.done %s1603, 128
        $region56: #{tpu_custom_call.1} parent=51 // pred_fallthru
          _
      $region52: #{tpu_custom_call.1} parent=5 // pred_fallthru
        _
    $region6: #{tpu_custom_call.1} parent=1 // loop_footer
      %s17 = sadd.s32 1, %s13
    $region7: #{tpu_custom_call.1} parent=1 // loop_footer_branch
      %12 = sbr.rel target = $region3
    $region8: #{tpu_custom_call.1} parent=1 // loop_exit
      _
    %1608 = vsyncpa [#allocation4], 1
    %s1609 = scalar_lea.sflag [#allocation4], 1
    %1610 = vsyncpa %s1609, 1

</llo_original>
